<compile_context>
chip_gen: v7x
topology: tpu7x:2x2x1
jax: 0.10.0
libtpu: 0.0.40
codegen_flags: <defaults>
</compile_context>

<pallas_src>
from functools import partial

import jax
import jax.numpy as jnp
from jax.experimental import pallas as pl
from jax.experimental.pallas import tpu as pltpu

# ---------------- configuration (small, consistent with the module) ----------
IMG = 32            # image size (module expects 224; scaled down)
PATCH = 16          # patch size (ViT-B/16 style)
WIDTH = 64          # transformer width (CLIP ViT-B uses 768)
LAYERS = 2          # transformer depth
HEADS = 4           # attention heads
FEAT = 32           # output feature dim (CLIP ViT-B -> 512)
EPS = 1e-5          # LayerNorm eps (PyTorch default, used by CLIP)

GRID = IMG // PATCH
NUM_PATCHES = GRID * GRID          # 4
SEQ = NUM_PATCHES + 1              # 5 (CLS + patches)
SEQ_PAD = 8                        # padded to a sublane multiple
HEAD_DIM = WIDTH // HEADS          # 16
CPP = 3 * PATCH * PATCH            # flattened patch length (768)
SMALL_ROWS = 8                     # packed per-layer small tensors (rows)
SMALL_COLS = 4 * WIDTH             # 256, sized by the largest vector (b_fc)
NEG_INF = -1e30


# ---------------- in-kernel helper -------------------------------------------
def _layernorm(x, g, b):
    mu = jnp.mean(x, axis=-1, keepdims=True)
    var = jnp.mean(jnp.square(x - mu), axis=-1, keepdims=True)
    return (x - mu) * jax.lax.rsqrt(var + EPS) * g + b


# ---------------- the single fused kernel ------------------------------------
def _clip_vit_kernel(
    # layer-invariant inputs
    patches_ref,        # (NUM_PATCHES, CPP) bf16   -- this image's patches
    w_patch_ref,        # (CPP, WIDTH)      bf16
    tok_init_ref,       # (SEQ_PAD, WIDTH)  f32     -- cls+pos template
    ln_gb_ref,          # (4, WIDTH)        f32     -- pre_g, pre_b, post_g, post_b
    proj_ref,           # (WIDTH, FEAT)     bf16
    # per-layer inputs (leading L dim selected by the layer grid index)
    w_qkv_ref,          # (WIDTH, 3*WIDTH)  bf16
    w_o_ref,            # (WIDTH, WIDTH)    bf16
    w_fc_ref,           # (WIDTH, 4*WIDTH)  bf16
    w_pr_ref,           # (4*WIDTH, WIDTH)  bf16
    small_ref,          # (8, 256)          f32     -- packed LN params & biases
    # output
    out_ref,            # (1, FEAT)         f32
    # scratch: residual token slab for the current image, carried across layers
    x_scr,              # (SEQ_PAD, WIDTH)  f32
    *, num_heads, head_dim):
    layer = pl.program_id(1)
    last_layer = pl.num_programs(1) - 1
    scale = 1.0 / (head_dim ** 0.5)
    width = num_heads * head_dim

    # ---- prologue (layer 0): patch embed + CLS/pos + ln_pre -----------------
    @pl.when(layer == 0)
    def _prologue():
        emb = jnp.dot(patches_ref[...], w_patch_ref[...],
                      preferred_element_type=jnp.float32)          # (NP, D)
        x_scr[...] = tok_init_ref[...]                             # cls+pos, pads=0
        x_scr[1:SEQ, :] = tok_init_ref[1:SEQ, :] + emb             # direct store
        x_scr[...] = _layernorm(x_scr[...],
                                ln_gb_ref[0:1, :], ln_gb_ref[1:2, :])

    # ---- per-layer small params: one packed DMA, sliced here ----------------
    sm = small_ref[...]                                            # (8, 256) f32
    ln1_g, ln1_b = sm[0:1, :width], sm[1:2, :width]
    b_qkv = sm[2:3, :3 * width]
    b_o = sm[3:4, :width]
    ln2_g, ln2_b = sm[4:5, :width], sm[5:6, :width]
    b_fc = sm[6:7, :4 * width]
    b_pr = sm[7:8, :width]

    x = x_scr[...]                                                 # (S_pad, D) f32

    # ---- attention: one lane-dense QKV matmul, per-head scores --------------
    h = _layernorm(x, ln1_g, ln1_b).astype(jnp.bfloat16)
    qkv = jnp.dot(h, w_qkv_ref[...],
                  preferred_element_type=jnp.float32) + b_qkv      # (S_pad, 3D) f32

    def split_heads(base):
        return jnp.stack(
            [qkv[:, base + hh * head_dim: base + (hh + 1) * head_dim]
             for hh in range(num_heads)], axis=0).astype(jnp.bfloat16)

    q = split_heads(0)                                             # (H, S_pad, dh)
    k = split_heads(width)
    v = split_heads(2 * width)

    s = jnp.einsum('hqd,hkd->hqk', q, k,
                   preferred_element_type=jnp.float32) * scale     # (H, S, S)
    kidx = jax.lax.broadcasted_iota(jnp.int32,
                                    (num_heads, SEQ_PAD, SEQ_PAD), 2)
    s = jnp.where(kidx < SEQ, s, NEG_INF)                          # mask pad keys
    m = jnp.max(s, axis=-1, keepdims=True)
    e = jnp.exp(s - m)
    p = e * pl.reciprocal(jnp.sum(e, axis=-1, keepdims=True), approx=True)

    ctx = jnp.einsum('hqk,hkd->hqd', p.astype(jnp.bfloat16), v,
                     preferred_element_type=jnp.float32)           # (H, S, dh) f32
    ctx = jnp.concatenate([ctx[hh] for hh in range(num_heads)],
                          axis=-1).astype(jnp.bfloat16)            # (S, D)
    x = x + jnp.dot(ctx, w_o_ref[...],
                    preferred_element_type=jnp.float32) + b_o      # merged out-proj

    # ---- MLP (QuickGELU) -----------------------------------------------------
    h2 = _layernorm(x, ln2_g, ln2_b).astype(jnp.bfloat16)
    mlp = jnp.dot(h2, w_fc_ref[...],
                  preferred_element_type=jnp.float32) + b_fc
    mlp = mlp * jax.nn.sigmoid(1.702 * mlp)                        # QuickGELU, f32
    mlp = jnp.dot(mlp.astype(jnp.bfloat16), w_pr_ref[...],
                  preferred_element_type=jnp.float32) + b_pr
    x = x + mlp
    x_scr[...] = x

    # ---- epilogue (last layer): ln_post on CLS token + projection -----------
    @pl.when(layer == last_layer)
    def _epilogue():
        pooled = _layernorm(x[0:1, :], ln_gb_ref[2:3, :], ln_gb_ref[3:4, :])
        out_ref[...] = jnp.dot(pooled.astype(jnp.bfloat16), proj_ref[...],
                               preferred_element_type=jnp.float32)


# ---------------- deterministic parameter init (synthetic, no checkpoint) ----
def init_params(key):
    ks = list(jax.random.split(key, 8 + LAYERS * 6))
    nk = iter(ks)

    def rnd(shape, scale=0.02):
        return jax.random.normal(next(nk), shape, jnp.float32) * scale

    params = {
        "w_patch": rnd((CPP, WIDTH)),                 # conv1 as matmul, no bias
        "cls": rnd((1, 1, WIDTH)),
        "pos": rnd((SEQ, WIDTH)),
        "ln_pre_g": jnp.ones((1, WIDTH), jnp.float32),
        "ln_pre_b": jnp.zeros((1, WIDTH), jnp.float32),
        "ln_post_g": jnp.ones((1, WIDTH), jnp.float32),
        "ln_post_b": jnp.zeros((1, WIDTH), jnp.float32),
        "proj": rnd((WIDTH, FEAT)),                   # no bias in CLIP
        "blocks": [],
    }
    for _ in range(LAYERS):
        params["blocks"].append({
            "ln1_g": jnp.ones((1, WIDTH), jnp.float32),
            "ln1_b": jnp.zeros((1, WIDTH), jnp.float32),
            "w_qkv": rnd((WIDTH, 3 * WIDTH)),
            "b_qkv": jnp.zeros((1, 3 * WIDTH), jnp.float32),
            "w_o": rnd((WIDTH, WIDTH)),
            "b_o": jnp.zeros((1, WIDTH), jnp.float32),
            "ln2_g": jnp.ones((1, WIDTH), jnp.float32),
            "ln2_b": jnp.zeros((1, WIDTH), jnp.float32),
            "w_fc": rnd((WIDTH, 4 * WIDTH)),
            "b_fc": jnp.zeros((1, 4 * WIDTH), jnp.float32),
            "w_pr": rnd((4 * WIDTH, WIDTH)),
            "b_pr": jnp.zeros((1, WIDTH), jnp.float32),
        })
    return params


# ---------------- one-time repacking into kernel-friendly layout --------------
def pack_params(params):
    D = WIDTH

    # token template: row 0 = cls + pos[0]; rows 1..NP = pos[1..]; pad rows = 0
    tok_init = jnp.zeros((SEQ_PAD, D), jnp.float32)
    tok_init = tok_init.at[0].set(params["cls"].reshape(D) + params["pos"][0])
    tok_init = tok_init.at[1:SEQ].set(params["pos"][1:])

    # pre/post LayerNorm params packed into one (4, D) array
    ln_gb = jnp.concatenate([params["ln_pre_g"], params["ln_pre_b"],
                             params["ln_post_g"], params["ln_post_b"]], axis=0)

    def stack(fn):
        return jnp.stack([fn(blk) for blk in params["blocks"]], axis=0)

    def row(v):
        v = v.reshape(-1)
        return jnp.pad(v, (0, SMALL_COLS - v.shape[0]))

    # all tiny per-layer tensors packed into one (L, 8, 256) array (one DMA/step)
    small = stack(lambda b: jnp.stack(
        [row(b["ln1_g"]), row(b["ln1_b"]), row(b["b_qkv"]), row(b["b_o"]),
         row(b["ln2_g"]), row(b["ln2_b"]), row(b["b_fc"]), row(b["b_pr"])],
        axis=0))

    return {
        "w_patch": params["w_patch"].astype(jnp.bfloat16),
        "tok_init": tok_init,
        "ln_gb": ln_gb,
        "proj": params["proj"].astype(jnp.bfloat16),
        "w_qkv": stack(lambda b: b["w_qkv"]).astype(jnp.bfloat16),
        "w_o": stack(lambda b: b["w_o"]).astype(jnp.bfloat16),
        "w_fc": stack(lambda b: b["w_fc"]).astype(jnp.bfloat16),
        "w_pr": stack(lambda b: b["w_pr"]).astype(jnp.bfloat16),
        "small": small,
    }


# ---------------- BlockSpec helpers -------------------------------------------
def _const_spec(arr):
    nd = arr.ndim
    return pl.BlockSpec(arr.shape, lambda b, l, nd=nd: (0,) * nd)


def _layer_spec(arr):
    nd = arr.ndim
    return pl.BlockSpec((None,) + arr.shape[1:],
                        lambda b, l, nd=nd: (l,) + (0,) * (nd - 1))


# ---------------- forward pass ------------------------------------------------
def clip_backbone_forward(packed, x):
    """x: (B, 3, IMG, IMG) NCHW float32 -> (B, FEAT) float32."""
    B = x.shape[0]

    # stride-P conv == matmul on flattened (c,i,j) patches; pre-cast to bf16
    # TODO(synk): at 224x224 scale, move this NCHW->patch rearrangement into the
    # kernel via a (GRID, GRID) image BlockSpec to avoid the XLA transpose copy.
    patches = (x.reshape(B, 3, GRID, PATCH, GRID, PATCH)
                 .transpose(0, 2, 4, 1, 3, 5)
                 .reshape(B, NUM_PATCHES, CPP)
                 .astype(jnp.bfloat16))

    # TODO(synk): at real CLIP width, tile w_fc/w_pr along the 4*WIDTH hidden dim
    # with an extra "arbitrary" grid axis so double-buffered layer weights stay
    # inside v7x's 64 MiB VMEM.
    out = pl.pallas_call(
        partial(_clip_vit_kernel, num_heads=HEADS, head_dim=HEAD_DIM),
        out_shape=jax.ShapeDtypeStruct((B, 1, FEAT), jnp.float32),
        grid=(B, LAYERS),
        in_specs=[
            pl.BlockSpec((None, NUM_PATCHES, CPP), lambda b, l: (b, 0, 0)),
            _const_spec(packed["w_patch"]),
            _const_spec(packed["tok_init"]),
            _const_spec(packed["ln_gb"]),
            _const_spec(packed["proj"]),
            _layer_spec(packed["w_qkv"]),
            _layer_spec(packed["w_o"]),
            _layer_spec(packed["w_fc"]),
            _layer_spec(packed["w_pr"]),
            _layer_spec(packed["small"]),
        ],
        out_specs=pl.BlockSpec((None, 1, FEAT), lambda b, l: (b, 0, 0)),
        scratch_shapes=[pltpu.VMEM((SEQ_PAD, WIDTH), jnp.float32)],
        compiler_params=pltpu.CompilerParams(
            # batch axis "parallel" -> both v7x TensorCores get work;
            # layer axis "arbitrary" (residual stream carried in x_scr).
            dimension_semantics=("parallel", "arbitrary"),
            vmem_limit_bytes=64 * 1024 * 1024),
    )(patches, packed["w_patch"], packed["tok_init"], packed["ln_gb"],
      packed["proj"], packed["w_qkv"], packed["w_o"], packed["w_fc"],
      packed["w_pr"], packed["small"])
    return out.reshape(B, FEAT)


if __name__ == "__main__":
    key = jax.random.PRNGKey(0)
    pkey, xkey = jax.random.split(key)
    params = init_params(pkey)
    x = jax.random.normal(xkey, (2, 3, IMG, IMG), jnp.float32)  # NCHW like torch

    packed = pack_params(params)
    fwd = jax.jit(clip_backbone_forward)
    out = jax.block_until_ready(fwd(packed, x))

    assert out.shape == (x.shape[0], FEAT) and out.dtype == jnp.float32
    assert bool(jnp.all(jnp.isfinite(out)))
    print("KERNEL_OK")
</pallas_src>

<mosaic_0001>
module attributes {stable_mosaic.version = 11 : i64} {
  func.func @_clip_vit_kernel(%arg0: i32, %arg1: i32, %arg2: memref<1x4x768xbf16, #tpu.memory_space<vmem>>, %arg3: memref<768x64xbf16, #tpu.memory_space<vmem>>, %arg4: memref<8x64xf32, #tpu.memory_space<vmem>>, %arg5: memref<4x64xf32, #tpu.memory_space<vmem>>, %arg6: memref<64x32xbf16, #tpu.memory_space<vmem>>, %arg7: memref<1x64x192xbf16, #tpu.memory_space<vmem>>, %arg8: memref<1x64x64xbf16, #tpu.memory_space<vmem>>, %arg9: memref<1x64x256xbf16, #tpu.memory_space<vmem>>, %arg10: memref<1x256x64xbf16, #tpu.memory_space<vmem>>, %arg11: memref<1x8x256xf32, #tpu.memory_space<vmem>>, %arg12: memref<1x1x32xf32, #tpu.memory_space<vmem>>, %arg13: memref<8x64xf32, #tpu.memory_space<vmem>>) attributes {dimension_semantics = [#tpu.dimension_semantics<parallel>, #tpu.dimension_semantics<arbitrary>], iteration_bounds = array<i64: 2, 2>, scalar_prefetch = 0 : i64, scratch_operands = 1 : i64, tpu.core_type = #tpu.core_type<tc>, window_params = [{transform_indices = @transform_0, window_bounds = array<i64: 1, 4, 768>}, {pipeline_mode = #tpu.pipeline_mode<synchronous>, transform_indices = @transform_1, window_bounds = array<i64: 768, 64>}, {pipeline_mode = #tpu.pipeline_mode<synchronous>, transform_indices = @transform_2, window_bounds = array<i64: 8, 64>}, {pipeline_mode = #tpu.pipeline_mode<synchronous>, transform_indices = @transform_3, window_bounds = array<i64: 4, 64>}, {pipeline_mode = #tpu.pipeline_mode<synchronous>, transform_indices = @transform_4, window_bounds = array<i64: 64, 32>}, {transform_indices = @transform_5, window_bounds = array<i64: 1, 64, 192>}, {transform_indices = @transform_6, window_bounds = array<i64: 1, 64, 64>}, {transform_indices = @transform_7, window_bounds = array<i64: 1, 64, 256>}, {transform_indices = @transform_8, window_bounds = array<i64: 1, 256, 64>}, {transform_indices = @transform_9, window_bounds = array<i64: 1, 8, 256>}, {transform_indices = @transform_10, window_bounds = array<i64: 1, 1, 32>}]} {
    %c0_i32 = arith.constant 0 : i32
    %0 = arith.cmpi eq, %arg1, %c0_i32 : i32
    %1 = arith.extui %0 : i1 to i32
    %c0_i32_0 = arith.constant 0 : i32
    %2 = arith.cmpi ne, %1, %c0_i32_0 : i32
    scf.if %2 {
      %c0_41 = arith.constant 0 : index
      %c0_42 = arith.constant 0 : index
      %c0_43 = arith.constant 0 : index
      %155 = vector.load %arg2[%c0_41, %c0_42, %c0_43] : memref<1x4x768xbf16, #tpu.memory_space<vmem>>, vector<1x4x768xbf16>
      %156 = vector.shape_cast %155 : vector<1x4x768xbf16> to vector<4x768xbf16>
      %c0_44 = arith.constant 0 : index
      %c0_45 = arith.constant 0 : index
      %157 = vector.load %arg3[%c0_44, %c0_45] : memref<768x64xbf16, #tpu.memory_space<vmem>>, vector<768x64xbf16>
      %cst_46 = arith.constant dense<0.000000e+00> : vector<4x64xf32>
      %158 = tpu.matmul %156, %157, %cst_46 {dimension_numbers = #tpu.dot_dimension_numbers<[1], [0], [0], [1], [0, 0, 1, 1], [], []>} : vector<4x768xbf16>, vector<768x64xbf16>, vector<4x64xf32> -> vector<4x64xf32>
      %c0_47 = arith.constant 0 : index
      %c0_48 = arith.constant 0 : index
      %159 = vector.load %arg4[%c0_47, %c0_48] : memref<8x64xf32, #tpu.memory_space<vmem>>, vector<8x64xf32>
      %c0_49 = arith.constant 0 : index
      %c0_50 = arith.constant 0 : index
      %160 = vector.load %arg13[%c0_49, %c0_50] : memref<8x64xf32, #tpu.memory_space<vmem>>, vector<8x64xf32>
      tpu.vector_store %arg13[%c0_49, %c0_50], %159 {strides = array<i32>} : memref<8x64xf32, #tpu.memory_space<vmem>>, vector<8x64xf32>,
      %c1 = arith.constant 1 : index
      %c0_51 = arith.constant 0 : index
      %161 = vector.load %arg4[%c1, %c0_51] : memref<8x64xf32, #tpu.memory_space<vmem>>, vector<4x64xf32>
      %162 = arith.addf %161, %158 : vector<4x64xf32>
      %c1_52 = arith.constant 1 : index
      %c0_53 = arith.constant 0 : index
      %163 = vector.load %arg13[%c1_52, %c0_53] : memref<8x64xf32, #tpu.memory_space<vmem>>, vector<4x64xf32>
      tpu.vector_store %arg13[%c1_52, %c0_53], %162 {strides = array<i32>} : memref<8x64xf32, #tpu.memory_space<vmem>>, vector<4x64xf32>,
      %c0_54 = arith.constant 0 : index
      %c0_55 = arith.constant 0 : index
      %164 = vector.load %arg13[%c0_54, %c0_55] : memref<8x64xf32, #tpu.memory_space<vmem>>, vector<8x64xf32>
      %c0_56 = arith.constant 0 : index
      %c0_57 = arith.constant 0 : index
      %165 = vector.load %arg5[%c0_56, %c0_57] : memref<4x64xf32, #tpu.memory_space<vmem>>, vector<1x64xf32>
      %c1_58 = arith.constant 1 : index
      %c0_59 = arith.constant 0 : index
      %166 = vector.load %arg5[%c1_58, %c0_59] : memref<4x64xf32, #tpu.memory_space<vmem>>, vector<1x64xf32>
      %cst_60 = arith.constant dense<0.000000e+00> : vector<8xf32>
      %167 = vector.multi_reduction <add>, %164, %cst_60 [1] : vector<8x64xf32> to vector<8xf32>
      %168 = vector.shape_cast %167 : vector<8xf32> to vector<8x1xf32>
      %cst_61 = arith.constant 6.400000e+01 : f32
      %169 = vector.broadcast %cst_61 : f32 to vector<8x1xf32>
      %170 = arith.divf %168, %169 : vector<8x1xf32>
      %171 = vector.broadcast %170 : vector<8x1xf32> to vector<8x64xf32>
      %172 = arith.subf %164, %171 : vector<8x64xf32>
      %173 = arith.mulf %172, %172 : vector<8x64xf32>
      %cst_62 = arith.constant dense<0.000000e+00> : vector<8xf32>
      %174 = vector.multi_reduction <add>, %173, %cst_62 [1] : vector<8x64xf32> to vector<8xf32>
      %175 = vector.shape_cast %174 : vector<8xf32> to vector<8x1xf32>
      %cst_63 = arith.constant 6.400000e+01 : f32
      %176 = vector.broadcast %cst_63 : f32 to vector<8x1xf32>
      %177 = arith.divf %175, %176 : vector<8x1xf32>
      %178 = vector.broadcast %170 : vector<8x1xf32> to vector<8x64xf32>
      %179 = arith.subf %164, %178 : vector<8x64xf32>
      %cst_64 = arith.constant 9.99999974E-6 : f32
      %180 = vector.broadcast %cst_64 : f32 to vector<8x1xf32>
      %181 = arith.addf %177, %180 : vector<8x1xf32>
      %182 = math.rsqrt %181 : vector<8x1xf32>
      %183 = vector.broadcast %182 : vector<8x1xf32> to vector<8x64xf32>
      %184 = arith.mulf %179, %183 : vector<8x64xf32>
      %185 = vector.broadcast %165 : vector<1x64xf32> to vector<8x64xf32>
      %186 = arith.mulf %184, %185 : vector<8x64xf32>
      %187 = vector.broadcast %166 : vector<1x64xf32> to vector<8x64xf32>
      %188 = arith.addf %186, %187 : vector<8x64xf32>
      %c0_65 = arith.constant 0 : index
      %c0_66 = arith.constant 0 : index
      %189 = vector.load %arg13[%c0_65, %c0_66] : memref<8x64xf32, #tpu.memory_space<vmem>>, vector<8x64xf32>
      tpu.vector_store %arg13[%c0_65, %c0_66], %188 {strides = array<i32>} : memref<8x64xf32, #tpu.memory_space<vmem>>, vector<8x64xf32>,
    } else {
    }
    %c0 = arith.constant 0 : index
    %c0_1 = arith.constant 0 : index
    %c0_2 = arith.constant 0 : index
    %3 = vector.load %arg11[%c0, %c0_1, %c0_2] : memref<1x8x256xf32, #tpu.memory_space<vmem>>, vector<1x8x256xf32>
    %4 = vector.shape_cast %3 : vector<1x8x256xf32> to vector<8x256xf32>
    %5 = vector.extract_strided_slice %4 {offsets = [0, 0], sizes = [1, 64], strides = [1, 1]} : vector<8x256xf32> to vector<1x64xf32>
    %6 = vector.extract_strided_slice %4 {offsets = [1, 0], sizes = [1, 64], strides = [1, 1]} : vector<8x256xf32> to vector<1x64xf32>
    %7 = vector.extract_strided_slice %4 {offsets = [2, 0], sizes = [1, 192], strides = [1, 1]} : vector<8x256xf32> to vector<1x192xf32>
    %8 = vector.extract_strided_slice %4 {offsets = [3, 0], sizes = [1, 64], strides = [1, 1]} : vector<8x256xf32> to vector<1x64xf32>
    %9 = vector.extract_strided_slice %4 {offsets = [4, 0], sizes = [1, 64], strides = [1, 1]} : vector<8x256xf32> to vector<1x64xf32>
    %10 = vector.extract_strided_slice %4 {offsets = [5, 0], sizes = [1, 64], strides = [1, 1]} : vector<8x256xf32> to vector<1x64xf32>
    %11 = vector.extract_strided_slice %4 {offsets = [6, 0], sizes = [1, 256], strides = [1, 1]} : vector<8x256xf32> to vector<1x256xf32>
    %12 = vector.extract_strided_slice %4 {offsets = [7, 0], sizes = [1, 64], strides = [1, 1]} : vector<8x256xf32> to vector<1x64xf32>
    %c0_3 = arith.constant 0 : index
    %c0_4 = arith.constant 0 : index
    %13 = vector.load %arg13[%c0_3, %c0_4] : memref<8x64xf32, #tpu.memory_space<vmem>>, vector<8x64xf32>
    %cst = arith.constant dense<0.000000e+00> : vector<8xf32>
    %14 = vector.multi_reduction <add>, %13, %cst [1] : vector<8x64xf32> to vector<8xf32>
    %15 = vector.shape_cast %14 : vector<8xf32> to vector<8x1xf32>
    %cst_5 = arith.constant 6.400000e+01 : f32
    %16 = vector.broadcast %cst_5 : f32 to vector<8x1xf32>
    %17 = arith.divf %15, %16 : vector<8x1xf32>
    %18 = vector.broadcast %17 : vector<8x1xf32> to vector<8x64xf32>
    %19 = arith.subf %13, %18 : vector<8x64xf32>
    %20 = arith.mulf %19, %19 : vector<8x64xf32>
    %cst_6 = arith.constant dense<0.000000e+00> : vector<8xf32>
    %21 = vector.multi_reduction <add>, %20, %cst_6 [1] : vector<8x64xf32> to vector<8xf32>
    %22 = vector.shape_cast %21 : vector<8xf32> to vector<8x1xf32>
    %cst_7 = arith.constant 6.400000e+01 : f32
    %23 = vector.broadcast %cst_7 : f32 to vector<8x1xf32>
    %24 = arith.divf %22, %23 : vector<8x1xf32>
    %25 = vector.broadcast %17 : vector<8x1xf32> to vector<8x64xf32>
    %26 = arith.subf %13, %25 : vector<8x64xf32>
    %cst_8 = arith.constant 9.99999974E-6 : f32
    %27 = vector.broadcast %cst_8 : f32 to vector<8x1xf32>
    %28 = arith.addf %24, %27 : vector<8x1xf32>
    %29 = math.rsqrt %28 : vector<8x1xf32>
    %30 = vector.broadcast %29 : vector<8x1xf32> to vector<8x64xf32>
    %31 = arith.mulf %26, %30 : vector<8x64xf32>
    %32 = vector.broadcast %5 : vector<1x64xf32> to vector<8x64xf32>
    %33 = arith.mulf %31, %32 : vector<8x64xf32>
    %34 = vector.broadcast %6 : vector<1x64xf32> to vector<8x64xf32>
    %35 = arith.addf %33, %34 : vector<8x64xf32>
    %36 = arith.truncf %35 : vector<8x64xf32> to vector<8x64xbf16>
    %c0_9 = arith.constant 0 : index
    %c0_10 = arith.constant 0 : index
    %c0_11 = arith.constant 0 : index
    %37 = vector.load %arg7[%c0_9, %c0_10, %c0_11] : memref<1x64x192xbf16, #tpu.memory_space<vmem>>, vector<1x64x192xbf16>
    %38 = vector.shape_cast %37 : vector<1x64x192xbf16> to vector<64x192xbf16>
    %cst_12 = arith.constant dense<0.000000e+00> : vector<8x192xf32>
    %39 = tpu.matmul %36, %38, %cst_12 {dimension_numbers = #tpu.dot_dimension_numbers<[1], [0], [0], [1], [0, 0, 1, 1], [], []>} : vector<8x64xbf16>, vector<64x192xbf16>, vector<8x192xf32> -> vector<8x192xf32>
    %40 = vector.broadcast %7 : vector<1x192xf32> to vector<8x192xf32>
    %41 = arith.addf %39, %40 : vector<8x192xf32>
    %42 = vector.extract_strided_slice %41 {offsets = [0, 0], sizes = [8, 16], strides = [1, 1]} : vector<8x192xf32> to vector<8x16xf32>
    %43 = vector.extract_strided_slice %41 {offsets = [0, 16], sizes = [8, 16], strides = [1, 1]} : vector<8x192xf32> to vector<8x16xf32>
    %44 = vector.extract_strided_slice %41 {offsets = [0, 32], sizes = [8, 16], strides = [1, 1]} : vector<8x192xf32> to vector<8x16xf32>
    %45 = vector.extract_strided_slice %41 {offsets = [0, 48], sizes = [8, 16], strides = [1, 1]} : vector<8x192xf32> to vector<8x16xf32>
    %46 = vector.shape_cast %42 : vector<8x16xf32> to vector<1x8x16xf32>
    %47 = vector.shape_cast %43 : vector<8x16xf32> to vector<1x8x16xf32>
    %48 = vector.shape_cast %44 : vector<8x16xf32> to vector<1x8x16xf32>
    %49 = vector.shape_cast %45 : vector<8x16xf32> to vector<1x8x16xf32>
    %50 = tpu.concatenate %46, %47, %48, %49 in 0 : vector<1x8x16xf32>, vector<1x8x16xf32>, vector<1x8x16xf32>, vector<1x8x16xf32> -> vector<4x8x16xf32>
    %51 = arith.truncf %50 : vector<4x8x16xf32> to vector<4x8x16xbf16>
    %52 = vector.extract_strided_slice %41 {offsets = [0, 64], sizes = [8, 16], strides = [1, 1]} : vector<8x192xf32> to vector<8x16xf32>
    %53 = vector.extract_strided_slice %41 {offsets = [0, 80], sizes = [8, 16], strides = [1, 1]} : vector<8x192xf32> to vector<8x16xf32>
    %54 = vector.extract_strided_slice %41 {offsets = [0, 96], sizes = [8, 16], strides = [1, 1]} : vector<8x192xf32> to vector<8x16xf32>
    %55 = vector.extract_strided_slice %41 {offsets = [0, 112], sizes = [8, 16], strides = [1, 1]} : vector<8x192xf32> to vector<8x16xf32>
    %56 = vector.shape_cast %52 : vector<8x16xf32> to vector<1x8x16xf32>
    %57 = vector.shape_cast %53 : vector<8x16xf32> to vector<1x8x16xf32>
    %58 = vector.shape_cast %54 : vector<8x16xf32> to vector<1x8x16xf32>
    %59 = vector.shape_cast %55 : vector<8x16xf32> to vector<1x8x16xf32>
    %60 = tpu.concatenate %56, %57, %58, %59 in 0 : vector<1x8x16xf32>, vector<1x8x16xf32>, vector<1x8x16xf32>, vector<1x8x16xf32> -> vector<4x8x16xf32>
    %61 = arith.truncf %60 : vector<4x8x16xf32> to vector<4x8x16xbf16>
    %62 = vector.extract_strided_slice %41 {offsets = [0, 128], sizes = [8, 16], strides = [1, 1]} : vector<8x192xf32> to vector<8x16xf32>
    %63 = vector.extract_strided_slice %41 {offsets = [0, 144], sizes = [8, 16], strides = [1, 1]} : vector<8x192xf32> to vector<8x16xf32>
    %64 = vector.extract_strided_slice %41 {offsets = [0, 160], sizes = [8, 16], strides = [1, 1]} : vector<8x192xf32> to vector<8x16xf32>
    %65 = vector.extract_strided_slice %41 {offsets = [0, 176], sizes = [8, 16], strides = [1, 1]} : vector<8x192xf32> to vector<8x16xf32>
    %66 = vector.shape_cast %62 : vector<8x16xf32> to vector<1x8x16xf32>
    %67 = vector.shape_cast %63 : vector<8x16xf32> to vector<1x8x16xf32>
    %68 = vector.shape_cast %64 : vector<8x16xf32> to vector<1x8x16xf32>
    %69 = vector.shape_cast %65 : vector<8x16xf32> to vector<1x8x16xf32>
    %70 = tpu.concatenate %66, %67, %68, %69 in 0 : vector<1x8x16xf32>, vector<1x8x16xf32>, vector<1x8x16xf32>, vector<1x8x16xf32> -> vector<4x8x16xf32>
    %71 = arith.truncf %70 : vector<4x8x16xf32> to vector<4x8x16xbf16>
    "tpu.trace_start"() <{level = 10 : i32, message = "hqd,hkd->hqk"}> : () -> ()
    %cst_13 = arith.constant dense<0.000000e+00> : vector<4x8x8xf32>
    %72 = tpu.matmul %51, %61, %cst_13 {dimension_numbers = #tpu.dot_dimension_numbers<[2], [2], [1], [1], [0, 0, 0, 1, 1, 1], [0], [0]>} : vector<4x8x16xbf16>, vector<4x8x16xbf16>, vector<4x8x8xf32> -> vector<4x8x8xf32>
    "tpu.trace_stop"() : () -> ()
    %cst_14 = arith.constant 2.500000e-01 : f32
    %73 = vector.broadcast %cst_14 : f32 to vector<4x8x8xf32>
    %74 = arith.mulf %72, %73 : vector<4x8x8xf32>
    %75 = tpu.iota {dimensions = array<i32: 2>} : vector<4x8x8xi32>
    %c5_i32 = arith.constant 5 : i32
    %76 = vector.broadcast %c5_i32 : i32 to vector<4x8x8xi32>
    %77 = arith.cmpi slt, %75, %76 : vector<4x8x8xi32>
    %cst_15 = arith.constant -1.000000e+30 : f32
    %78 = vector.broadcast %cst_15 : f32 to vector<4x8x8xf32>
    %79 = arith.select %77, %74, %78 : vector<4x8x8xi1>, vector<4x8x8xf32>
    %cst_16 = arith.constant dense<0xFF800000> : vector<4x8xf32>
    %80 = vector.multi_reduction <maximumf>, %79, %cst_16 [2] : vector<4x8x8xf32> to vector<4x8xf32>
    %81 = vector.shape_cast %80 : vector<4x8xf32> to vector<4x8x1xf32>
    %82 = vector.broadcast %81 : vector<4x8x1xf32> to vector<4x8x8xf32>
    %83 = arith.subf %79, %82 : vector<4x8x8xf32>
    %84 = math.exp %83 : vector<4x8x8xf32>
    %cst_17 = arith.constant dense<0.000000e+00> : vector<4x8xf32>
    %85 = vector.multi_reduction <add>, %84, %cst_17 [2] : vector<4x8x8xf32> to vector<4x8xf32>
    %86 = vector.shape_cast %85 : vector<4x8xf32> to vector<4x8x1xf32>
    %87 = tpu.reciprocal %86 {approx = true} : vector<4x8x1xf32> -> vector<4x8x1xf32>
    %88 = vector.broadcast %87 : vector<4x8x1xf32> to vector<4x8x8xf32>
    %89 = arith.mulf %84, %88 : vector<4x8x8xf32>
    %90 = arith.truncf %89 : vector<4x8x8xf32> to vector<4x8x8xbf16>
    "tpu.trace_start"() <{level = 10 : i32, message = "hqk,hkd->hqd"}> : () -> ()
    %cst_18 = arith.constant dense<0.000000e+00> : vector<4x8x16xf32>
    %91 = tpu.matmul %90, %71, %cst_18 {dimension_numbers = #tpu.dot_dimension_numbers<[2], [1], [1], [2], [0, 0, 0, 1, 1, 2], [0], [0]>} : vector<4x8x8xbf16>, vector<4x8x16xbf16>, vector<4x8x16xf32> -> vector<4x8x16xf32>
    "tpu.trace_stop"() : () -> ()
    %92 = vector.extract_strided_slice %91 {offsets = [0, 0, 0], sizes = [1, 8, 16], strides = [1, 1, 1]} : vector<4x8x16xf32> to vector<1x8x16xf32>
    %93 = vector.shape_cast %92 : vector<1x8x16xf32> to vector<8x16xf32>
    %94 = vector.extract_strided_slice %91 {offsets = [1, 0, 0], sizes = [1, 8, 16], strides = [1, 1, 1]} : vector<4x8x16xf32> to vector<1x8x16xf32>
    %95 = vector.shape_cast %94 : vector<1x8x16xf32> to vector<8x16xf32>
    %96 = vector.extract_strided_slice %91 {offsets = [2, 0, 0], sizes = [1, 8, 16], strides = [1, 1, 1]} : vector<4x8x16xf32> to vector<1x8x16xf32>
    %97 = vector.shape_cast %96 : vector<1x8x16xf32> to vector<8x16xf32>
    %98 = vector.extract_strided_slice %91 {offsets = [3, 0, 0], sizes = [1, 8, 16], strides = [1, 1, 1]} : vector<4x8x16xf32> to vector<1x8x16xf32>
    %99 = vector.shape_cast %98 : vector<1x8x16xf32> to vector<8x16xf32>
    %100 = tpu.concatenate %93, %95, %97, %99 in 1 : vector<8x16xf32>, vector<8x16xf32>, vector<8x16xf32>, vector<8x16xf32> -> vector<8x64xf32>
    %101 = arith.truncf %100 : vector<8x64xf32> to vector<8x64xbf16>
    %c0_19 = arith.constant 0 : index
    %c0_20 = arith.constant 0 : index
    %c0_21 = arith.constant 0 : index
    %102 = vector.load %arg8[%c0_19, %c0_20, %c0_21] : memref<1x64x64xbf16, #tpu.memory_space<vmem>>, vector<1x64x64xbf16>
    %103 = vector.shape_cast %102 : vector<1x64x64xbf16> to vector<64x64xbf16>
    %cst_22 = arith.constant dense<0.000000e+00> : vector<8x64xf32>
    %104 = tpu.matmul %101, %103, %cst_22 {dimension_numbers = #tpu.dot_dimension_numbers<[1], [0], [0], [1], [0, 0, 1, 1], [], []>} : vector<8x64xbf16>, vector<64x64xbf16>, vector<8x64xf32> -> vector<8x64xf32>
    %105 = arith.addf %13, %104 : vector<8x64xf32>
    %106 = vector.broadcast %8 : vector<1x64xf32> to vector<8x64xf32>
    %107 = arith.addf %105, %106 : vector<8x64xf32>
    %cst_23 = arith.constant dense<0.000000e+00> : vector<8xf32>
    %108 = vector.multi_reduction <add>, %107, %cst_23 [1] : vector<8x64xf32> to vector<8xf32>
    %109 = vector.shape_cast %108 : vector<8xf32> to vector<8x1xf32>
    %cst_24 = arith.constant 6.400000e+01 : f32
    %110 = vector.broadcast %cst_24 : f32 to vector<8x1xf32>
    %111 = arith.divf %109, %110 : vector<8x1xf32>
    %112 = vector.broadcast %111 : vector<8x1xf32> to vector<8x64xf32>
    %113 = arith.subf %107, %112 : vector<8x64xf32>
    %114 = arith.mulf %113, %113 : vector<8x64xf32>
    %cst_25 = arith.constant dense<0.000000e+00> : vector<8xf32>
    %115 = vector.multi_reduction <add>, %114, %cst_25 [1] : vector<8x64xf32> to vector<8xf32>
    %116 = vector.shape_cast %115 : vector<8xf32> to vector<8x1xf32>
    %cst_26 = arith.constant 6.400000e+01 : f32
    %117 = vector.broadcast %cst_26 : f32 to vector<8x1xf32>
    %118 = arith.divf %116, %117 : vector<8x1xf32>
    %119 = vector.broadcast %111 : vector<8x1xf32> to vector<8x64xf32>
    %120 = arith.subf %107, %119 : vector<8x64xf32>
    %cst_27 = arith.constant 9.99999974E-6 : f32
    %121 = vector.broadcast %cst_27 : f32 to vector<8x1xf32>
    %122 = arith.addf %118, %121 : vector<8x1xf32>
    %123 = math.rsqrt %122 : vector<8x1xf32>
    %124 = vector.broadcast %123 : vector<8x1xf32> to vector<8x64xf32>
    %125 = arith.mulf %120, %124 : vector<8x64xf32>
    %126 = vector.broadcast %9 : vector<1x64xf32> to vector<8x64xf32>
    %127 = arith.mulf %125, %126 : vector<8x64xf32>
    %128 = vector.broadcast %10 : vector<1x64xf32> to vector<8x64xf32>
    %129 = arith.addf %127, %128 : vector<8x64xf32>
    %130 = arith.truncf %129 : vector<8x64xf32> to vector<8x64xbf16>
    %c0_28 = arith.constant 0 : index
    %c0_29 = arith.constant 0 : index
    %c0_30 = arith.constant 0 : index
    %131 = vector.load %arg9[%c0_28, %c0_29, %c0_30] : memref<1x64x256xbf16, #tpu.memory_space<vmem>>, vector<1x64x256xbf16>
    %132 = vector.shape_cast %131 : vector<1x64x256xbf16> to vector<64x256xbf16>
    %cst_31 = arith.constant dense<0.000000e+00> : vector<8x256xf32>
    %133 = tpu.matmul %130, %132, %cst_31 {dimension_numbers = #tpu.dot_dimension_numbers<[1], [0], [0], [1], [0, 0, 1, 1], [], []>} : vector<8x64xbf16>, vector<64x256xbf16>, vector<8x256xf32> -> vector<8x256xf32>
    %134 = vector.broadcast %11 : vector<1x256xf32> to vector<8x256xf32>
    %135 = arith.addf %133, %134 : vector<8x256xf32>
    %cst_32 = arith.constant 1.702000e+00 : f32
    %136 = vector.broadcast %cst_32 : f32 to vector<8x256xf32>
    %137 = arith.mulf %136, %135 : vector<8x256xf32>
    %138 = arith.negf %137 : vector<8x256xf32>
    %139 = math.exp %138 : vector<8x256xf32>
    %cst_33 = arith.constant 1.000000e+00 : f32
    %140 = vector.broadcast %cst_33 : f32 to vector<8x256xf32>
    %141 = arith.addf %140, %139 : vector<8x256xf32>
    %142 = arith.divf %140, %141 : vector<8x256xf32>
    %143 = arith.mulf %135, %142 : vector<8x256xf32>
    %144 = arith.truncf %143 : vector<8x256xf32> to vector<8x256xbf16>
    %c0_34 = arith.constant 0 : index
    %c0_35 = arith.constant 0 : index
    %c0_36 = arith.constant 0 : index
    %145 = vector.load %arg10[%c0_34, %c0_35, %c0_36] : memref<1x256x64xbf16, #tpu.memory_space<vmem>>, vector<1x256x64xbf16>
    %146 = vector.shape_cast %145 : vector<1x256x64xbf16> to vector<256x64xbf16>
    %cst_37 = arith.constant dense<0.000000e+00> : vector<8x64xf32>
    %147 = tpu.matmul %144, %146, %cst_37 {dimension_numbers = #tpu.dot_dimension_numbers<[1], [0], [0], [1], [0, 0, 1, 1], [], []>} : vector<8x256xbf16>, vector<256x64xbf16>, vector<8x64xf32> -> vector<8x64xf32>
    %148 = vector.broadcast %12 : vector<1x64xf32> to vector<8x64xf32>
    %149 = arith.addf %147, %148 : vector<8x64xf32>
    %150 = arith.addf %107, %149 : vector<8x64xf32>
    %c0_38 = arith.constant 0 : index
    %c0_39 = arith.constant 0 : index
    %151 = vector.load %arg13[%c0_38, %c0_39] : memref<8x64xf32, #tpu.memory_space<vmem>>, vector<8x64xf32>
    tpu.vector_store %arg13[%c0_38, %c0_39], %150 {strides = array<i32>} : memref<8x64xf32, #tpu.memory_space<vmem>>, vector<8x64xf32>,
    %c1_i32 = arith.constant 1 : i32
    %152 = arith.cmpi eq, %arg1, %c1_i32 : i32
    %153 = arith.extui %152 : i1 to i32
    %c0_i32_40 = arith.constant 0 : i32
    %154 = arith.cmpi ne, %153, %c0_i32_40 : i32
    scf.if %154 {
      %155 = vector.extract_strided_slice %150 {offsets = [0, 0], sizes = [1, 64], strides = [1, 1]} : vector<8x64xf32> to vector<1x64xf32>
      %c2 = arith.constant 2 : index
      %c0_41 = arith.constant 0 : index
      %156 = vector.load %arg5[%c2, %c0_41] : memref<4x64xf32, #tpu.memory_space<vmem>>, vector<1x64xf32>
      %c3 = arith.constant 3 : index
      %c0_42 = arith.constant 0 : index
      %157 = vector.load %arg5[%c3, %c0_42] : memref<4x64xf32, #tpu.memory_space<vmem>>, vector<1x64xf32>
      %cst_43 = arith.constant dense<0.000000e+00> : vector<1xf32>
      %158 = vector.multi_reduction <add>, %155, %cst_43 [1] : vector<1x64xf32> to vector<1xf32>
      %159 = vector.shape_cast %158 : vector<1xf32> to vector<1x1xf32>
      %cst_44 = arith.constant 6.400000e+01 : f32
      %160 = vector.broadcast %cst_44 : f32 to vector<1x1xf32>
      %161 = arith.divf %159, %160 : vector<1x1xf32>
      %162 = vector.broadcast %161 : vector<1x1xf32> to vector<1x64xf32>
      %163 = arith.subf %155, %162 : vector<1x64xf32>
      %164 = arith.mulf %163, %163 : vector<1x64xf32>
      %cst_45 = arith.constant dense<0.000000e+00> : vector<1xf32>
      %165 = vector.multi_reduction <add>, %164, %cst_45 [1] : vector<1x64xf32> to vector<1xf32>
      %166 = vector.shape_cast %165 : vector<1xf32> to vector<1x1xf32>
      %cst_46 = arith.constant 6.400000e+01 : f32
      %167 = vector.broadcast %cst_46 : f32 to vector<1x1xf32>
      %168 = arith.divf %166, %167 : vector<1x1xf32>
      %169 = vector.broadcast %161 : vector<1x1xf32> to vector<1x64xf32>
      %170 = arith.subf %155, %169 : vector<1x64xf32>
      %cst_47 = arith.constant 9.99999974E-6 : f32
      %171 = vector.broadcast %cst_47 : f32 to vector<1x1xf32>
      %172 = arith.addf %168, %171 : vector<1x1xf32>
      %173 = math.rsqrt %172 : vector<1x1xf32>
      %174 = vector.broadcast %173 : vector<1x1xf32> to vector<1x64xf32>
      %175 = arith.mulf %170, %174 : vector<1x64xf32>
      %176 = arith.mulf %175, %156 : vector<1x64xf32>
      %177 = arith.addf %176, %157 : vector<1x64xf32>
      %178 = arith.truncf %177 : vector<1x64xf32> to vector<1x64xbf16>
      %c0_48 = arith.constant 0 : index
      %c0_49 = arith.constant 0 : index
      %179 = vector.load %arg6[%c0_48, %c0_49] : memref<64x32xbf16, #tpu.memory_space<vmem>>, vector<64x32xbf16>
      %cst_50 = arith.constant dense<0.000000e+00> : vector<1x32xf32>
      %180 = tpu.matmul %178, %179, %cst_50 {dimension_numbers = #tpu.dot_dimension_numbers<[1], [0], [0], [1], [0, 0, 1, 1], [], []>} : vector<1x64xbf16>, vector<64x32xbf16>, vector<1x32xf32> -> vector<1x32xf32>
      %c0_51 = arith.constant 0 : index
      %c0_52 = arith.constant 0 : index
      %c0_53 = arith.constant 0 : index
      %181 = vector.load %arg12[%c0_51, %c0_52, %c0_53] : memref<1x1x32xf32, #tpu.memory_space<vmem>>, vector<1x1x32xf32>
      %182 = vector.shape_cast %181 : vector<1x1x32xf32> to vector<1x32xf32>
      %183 = vector.shape_cast %180 : vector<1x32xf32> to vector<1x1x32xf32>
      tpu.vector_store %arg12[%c0_51, %c0_52, %c0_53], %183 {strides = array<i32>} : memref<1x1x32xf32, #tpu.memory_space<vmem>>, vector<1x1x32xf32>,
    } else {
    }
    return
  }
  func.func @transform_0(%arg0: i32, %arg1: i32) -> (i32, i32, i32) {
    %c0_i32 = arith.constant 0 : i32
    %c0_i32_0 = arith.constant 0 : i32
    %c0_i32_1 = arith.constant 0 : i32
    return %arg0, %c0_i32, %c0_i32_0 : i32, i32, i32
  }
  func.func @transform_1(%arg0: i32, %arg1: i32) -> (i32, i32) {
    %c0_i32 = arith.constant 0 : i32
    %c0_i32_0 = arith.constant 0 : i32
    %c0_i32_1 = arith.constant 0 : i32
    return %c0_i32, %c0_i32_0 : i32, i32
  }
  func.func @transform_2(%arg0: i32, %arg1: i32) -> (i32, i32) {
    %c0_i32 = arith.constant 0 : i32
    %c0_i32_0 = arith.constant 0 : i32
    %c0_i32_1 = arith.constant 0 : i32
    return %c0_i32, %c0_i32_0 : i32, i32
  }
  func.func @transform_3(%arg0: i32, %arg1: i32) -> (i32, i32) {
    %c0_i32 = arith.constant 0 : i32
    %c0_i32_0 = arith.constant 0 : i32
    %c0_i32_1 = arith.constant 0 : i32
    return %c0_i32, %c0_i32_0 : i32, i32
  }
  func.func @transform_4(%arg0: i32, %arg1: i32) -> (i32, i32) {
    %c0_i32 = arith.constant 0 : i32
    %c0_i32_0 = arith.constant 0 : i32
    %c0_i32_1 = arith.constant 0 : i32
    return %c0_i32, %c0_i32_0 : i32, i32
  }
  func.func @transform_5(%arg0: i32, %arg1: i32) -> (i32, i32, i32) {
    %c0_i32 = arith.constant 0 : i32
    %c0_i32_0 = arith.constant 0 : i32
    %c0_i32_1 = arith.constant 0 : i32
    return %arg1, %c0_i32, %c0_i32_0 : i32, i32, i32
  }
  func.func @transform_6(%arg0: i32, %arg1: i32) -> (i32, i32, i32) {
    %c0_i32 = arith.constant 0 : i32
    %c0_i32_0 = arith.constant 0 : i32
    %c0_i32_1 = arith.constant 0 : i32
    return %arg1, %c0_i32, %c0_i32_0 : i32, i32, i32
  }
  func.func @transform_7(%arg0: i32, %arg1: i32) -> (i32, i32, i32) {
    %c0_i32 = arith.constant 0 : i32
    %c0_i32_0 = arith.constant 0 : i32
    %c0_i32_1 = arith.constant 0 : i32
    return %arg1, %c0_i32, %c0_i32_0 : i32, i32, i32
  }
  func.func @transform_8(%arg0: i32, %arg1: i32) -> (i32, i32, i32) {
    %c0_i32 = arith.constant 0 : i32
    %c0_i32_0 = arith.constant 0 : i32
    %c0_i32_1 = arith.constant 0 : i32
    return %arg1, %c0_i32, %c0_i32_0 : i32, i32, i32
  }
  func.func @transform_9(%arg0: i32, %arg1: i32) -> (i32, i32, i32) {
    %c0_i32 = arith.constant 0 : i32
    %c0_i32_0 = arith.constant 0 : i32
    %c0_i32_1 = arith.constant 0 : i32
    return %arg1, %c0_i32, %c0_i32_0 : i32, i32, i32
  }
  func.func @transform_10(%arg0: i32, %arg1: i32) -> (i32, i32, i32) {
    %c0_i32 = arith.constant 0 : i32
    %c0_i32_0 = arith.constant 0 : i32
    %c0_i32_1 = arith.constant 0 : i32
    return %arg0, %c0_i32, %c0_i32_0 : i32, i32, i32
  }
}

</mosaic_0001>

<llo_original>
// kernel: clip_backbone_forward.1
$region0: #{clip_backbone_forward.1}
  #allocation0 [shape = 'u32[]', space=smem, size = 0x4, offset = 0x4, fixed_abs, tag = 'smem constant byte address 0x4 - core index']
  #allocation1 [shape = 'u32[144,128]{1,0:T(1,128)}', space=vmem, size = 0x12000, scoped, tag = 'internal scratch']
  #allocation2 [shape = 'f32[8,64]{1,0:T(8,128)}', space=vmem, size = 0x1000, scoped, tag = 'scratch operand']
  %s0 = inlined_call_operand.hbm [shape: bf16[2,4,768], index: 0, kind: input, shape index: {}]
  %s1 = inlined_call_operand.hbm [shape: bf16[768,64], index: 1, kind: input, shape index: {}]
  %s2 = inlined_call_operand.hbm [shape: f32[8,64], index: 2, kind: input, shape index: {}]
  %s3 = inlined_call_operand.hbm [shape: f32[4,64], index: 3, kind: input, shape index: {}]
  %s4 = inlined_call_operand.hbm [shape: bf16[64,32], index: 4, kind: input, shape index: {}]
  %s5 = inlined_call_operand.hbm [shape: bf16[2,64,192], index: 5, kind: input, shape index: {}]
  %s6 = inlined_call_operand.hbm [shape: bf16[2,64,64], index: 6, kind: input, shape index: {}]
  %s7 = inlined_call_operand.hbm [shape: bf16[2,64,256], index: 7, kind: input, shape index: {}]
  %s8 = inlined_call_operand.hbm [shape: bf16[2,256,64], index: 8, kind: input, shape index: {}]
  %s9 = inlined_call_operand.hbm [shape: f32[2,8,256], index: 9, kind: input, shape index: {}]
  %s10 = inlined_call_operand.hbm [shape: f32[2,1,32], index: 10, kind: output, shape index: {}]
  %s11 = sld [smem:[#allocation0]]
  $region121: #{clip_backbone_forward.1} parent=0
    _
  %s13 = ssub.s32 1, %s11
  %s14 = scalar_select 0, %s13, %s11
  $region1: #{clip_backbone_forward.1} parent=0
    #allocation3 [shape = 'u8[12288]{0}', space=vmem, size = 0x3000, scoped, tag = 'input window, operand 0']
    #allocation4 [shape = 's32[2]{0}', space=sflag, size = 0x8, scoped, tag = 'scoped memory for clip_backbone_forward.1']
    #allocation5 [shape = 's32[2]{0}', space=sflag, size = 0x8, scoped, tag = 'scoped memory for clip_backbone_forward.1']
    #allocation6 [shape = 'u8[196608]{0}', space=vmem, size = 0x30000, scoped, tag = 'input window, operand 1, single buffered']
    #allocation7 [shape = 's32[1]{0}', space=sflag, size = 0x4, scoped, tag = 'scoped memory for clip_backbone_forward.1']
    #allocation8 [shape = 'u8[4096]{0}', space=vmem, size = 0x1000, scoped, tag = 'input window, operand 2, single buffered']
    #allocation9 [shape = 'u8[2048]{0}', space=vmem, size = 0x800, scoped, tag = 'input window, operand 3, single buffered']
    #allocation10 [shape = 's32[1]{0}', space=sflag, size = 0x4, scoped, tag = 'scoped memory for clip_backbone_forward.1']
    #allocation11 [shape = 'u8[16384]{0}', space=vmem, size = 0x4000, scoped, tag = 'input window, operand 4, single buffered']
    #allocation12 [shape = 'u8[65536]{0}', space=vmem, size = 0x10000, scoped, tag = 'input window, operand 5']
    #allocation13 [shape = 's32[2]{0}', space=sflag, size = 0x8, scoped, tag = 'scoped memory for clip_backbone_forward.1']
    #allocation14 [shape = 'u8[32768]{0}', space=vmem, size = 0x8000, scoped, tag = 'input window, operand 6']
    #allocation15 [shape = 'u8[65536]{0}', space=vmem, size = 0x10000, scoped, tag = 'input window, operand 7']
    #allocation16 [shape = 's32[2]{0}', space=sflag, size = 0x8, scoped, tag = 'scoped memory for clip_backbone_forward.1']
    #allocation17 [shape = 'u8[131072]{0}', space=vmem, size = 0x20000, scoped, tag = 'input window, operand 8']
    #allocation18 [shape = 'u8[16384]{0}', space=vmem, size = 0x4000, scoped, tag = 'input window, operand 9']
    #allocation19 [shape = 's32[2]{0}', space=sflag, size = 0x8, scoped, tag = 'scoped memory for clip_backbone_forward.1']
    #allocation20 [shape = 'u8[1024]{0}', space=vmem, size = 0x400, scoped, tag = 'output window, operand 0']
    %15 = vsyncpa [#allocation4], 0
    %s16 = scalar_lea.sflag [#allocation4], 1
    %17 = vsyncpa %s16, 0
    %18 = vsyncpa [#allocation7], 0
    %19 = vsyncpa [#allocation10], 0
    %20 = vsyncpa [#allocation13], 0
    %s21 = scalar_lea.sflag [#allocation13], 1
    %22 = vsyncpa %s21, 0
    %23 = vsyncpa [#allocation16], 0
    %s24 = scalar_lea.sflag [#allocation16], 1
    %25 = vsyncpa %s24, 0
    %26 = vsyncpa [#allocation19], 0
    %s27 = scalar_lea.sflag [#allocation19], 1
    %28 = vsyncpa %s27, 0
    %29 = vsyncpa [#allocation5], 0
    %s30 = scalar_lea.sflag [#allocation5], 1
    %31 = vsyncpa %s30, 0
    loop: start=0, step=1, limit=6
    $region2: #{clip_backbone_forward.1} parent=1 // loop_pre_header
      _
    $region3: #{clip_backbone_forward.1} parent=1 // loop_header
      %s33 = sphi 0, %s37
      %p34 = scmp.ge.s32.totalorder %s33, 6
      %s40 = sphi 0, %s52
      %s41 = sphi 0, %s48
      %s42 = sphi 0, %s40
      %s43 = sphi 0, %s41
      %s44 = sphi 0, %s42
      %s45 = sphi 0, %s43
      %s55 = sphi 0, %s57
      %s58 = sphi 0, %s55
      %s59 = sphi 0, %s58
      %s75 = sphi 0, %s59
      %s79 = sphi 0, %s79
      %s81 = sphi 0, %s79
      %s82 = sphi 0, %s81
      %s96 = sphi 0, %s82
      %s100 = sphi 0, %s100
      %s102 = sphi 0, %s100
      %s103 = sphi 0, %s102
      %s117 = sphi 0, %s103
      %s121 = sphi 0, %s121
      %s123 = sphi 0, %s121
      %s124 = sphi 0, %s123
      %s138 = sphi 0, %s124
      %s142 = sphi 0, %s142
      %s144 = sphi 0, %s142
      %s145 = sphi 0, %s144
      %s159 = sphi 0, %s145
      %s165 = sphi 0, %s167
      %s168 = sphi 0, %s165
      %s169 = sphi 0, %s168
      %s185 = sphi 0, %s169
      %s191 = sphi 0, %s193
      %s194 = sphi 0, %s191
      %s195 = sphi 0, %s194
      %s211 = sphi 0, %s195
      %s217 = sphi 0, %s219
      %s220 = sphi 0, %s217
      %s221 = sphi 0, %s220
      %s237 = sphi 0, %s221
      %s243 = sphi 0, %s245
      %s246 = sphi 0, %s243
      %s247 = sphi 0, %s246
      %s263 = sphi 0, %s247
      %s269 = sphi 0, %s271
      %s272 = sphi 0, %s269
      %s273 = sphi 0, %s272
      %s289 = sphi 0, %s273
      %s295 = sphi 0, %s297
      %s298 = sphi 0, %s295
      %s299 = sphi 0, %s298
      %s315 = sphi 0, %s299
    $region4: #{clip_backbone_forward.1} parent=1 // loop_header_branch
      %36 = sbr.rel (%p34) target = $region8
    $region5: #{clip_backbone_forward.1} parent=1 // loop_body
      %s38 = ssub.s32 %s33, 1
      %s39 = ssub.s32 %s33, 2
      %s46 = sadd.s32 1, %s41
      %p47 = scmp.ge.s32.totalorder %s46, 2
      %s48 = scalar_select %p47, 0, %s46
      %s49 = sadd.s32 1, %s40
      %s50 = scalar_select %p47, %s49, %s40
      %p51 = scmp.ge.s32.totalorder %s50, 2
      %s52 = scalar_select %p51, 0, %s50
      %s53 = ssub.s32 %s40, %s52
      %p54 = scmp.eq.s32.totalorder %s53, 0
      %s56 = sadd.s32 %s55, 1
      %s57 = scalar_select %p54, %s55, %s56
      %p60 = pneg %p54
      %p61 = scmp.eq.s32.totalorder %s33, 3
      %p62 = por %p60, %p61
      %p63 = scmp.ne.s32.totalorder %s55, %s58
      %p64 = scmp.eq.s32.totalorder %s33, 0
      %p65 = por %p63, %p64
      %p66 = scmp.ne.s32.totalorder %s55, %s58
      %p67 = scmp.eq.s32.totalorder %s38, 3
      %p68 = por %p66, %p67
      %p69 = scmp.ne.s32.totalorder %s58, %s59
      %p70 = scmp.eq.s32.totalorder %s38, 0
      %p71 = por %p69, %p70
      %p72 = scmp.ne.s32.totalorder %s58, %s59
      %p73 = scmp.eq.s32.totalorder %s39, 3
      %p74 = por %p72, %p73
      %p76 = scmp.ne.s32.totalorder %s59, %s75
      %p77 = scmp.eq.s32.totalorder %s39, 0
      %p78 = por %p76, %p77
      %s80 = sadd.s32 %s79, 1
      %p83 = scmp.eq.s32.totalorder %s33, 3
      %p84 = scmp.ne.s32.totalorder %s79, %s81
      %p85 = scmp.eq.s32.totalorder %s33, 0
      %p86 = por %p84, %p85
      %p87 = scmp.ne.s32.totalorder %s79, %s81
      %p88 = scmp.eq.s32.totalorder %s38, 3
      %p89 = por %p87, %p88
      %p90 = scmp.ne.s32.totalorder %s81, %s82
      %p91 = scmp.eq.s32.totalorder %s38, 0
      %p92 = por %p90, %p91
      %p93 = scmp.ne.s32.totalorder %s81, %s82
      %p94 = scmp.eq.s32.totalorder %s39, 3
      %p95 = por %p93, %p94
      %p97 = scmp.ne.s32.totalorder %s82, %s96
      %p98 = scmp.eq.s32.totalorder %s39, 0
      %p99 = por %p97, %p98
      %s101 = sadd.s32 %s100, 1
      %p104 = scmp.eq.s32.totalorder %s33, 3
      %p105 = scmp.ne.s32.totalorder %s100, %s102
      %p106 = scmp.eq.s32.totalorder %s33, 0
      %p107 = por %p105, %p106
      %p108 = scmp.ne.s32.totalorder %s100, %s102
      %p109 = scmp.eq.s32.totalorder %s38, 3
      %p110 = por %p108, %p109
      %p111 = scmp.ne.s32.totalorder %s102, %s103
      %p112 = scmp.eq.s32.totalorder %s38, 0
      %p113 = por %p111, %p112
      %p114 = scmp.ne.s32.totalorder %s102, %s103
      %p115 = scmp.eq.s32.totalorder %s39, 3
      %p116 = por %p114, %p115
      %p118 = scmp.ne.s32.totalorder %s103, %s117
      %p119 = scmp.eq.s32.totalorder %s39, 0
      %p120 = por %p118, %p119
      %s122 = sadd.s32 %s121, 1
      %p125 = scmp.eq.s32.totalorder %s33, 3
      %p126 = scmp.ne.s32.totalorder %s121, %s123
      %p127 = scmp.eq.s32.totalorder %s33, 0
      %p128 = por %p126, %p127
      %p129 = scmp.ne.s32.totalorder %s121, %s123
      %p130 = scmp.eq.s32.totalorder %s38, 3
      %p131 = por %p129, %p130
      %p132 = scmp.ne.s32.totalorder %s123, %s124
      %p133 = scmp.eq.s32.totalorder %s38, 0
      %p134 = por %p132, %p133
      %p135 = scmp.ne.s32.totalorder %s123, %s124
      %p136 = scmp.eq.s32.totalorder %s39, 3
      %p137 = por %p135, %p136
      %p139 = scmp.ne.s32.totalorder %s124, %s138
      %p140 = scmp.eq.s32.totalorder %s39, 0
      %p141 = por %p139, %p140
      %s143 = sadd.s32 %s142, 1
      %p146 = scmp.eq.s32.totalorder %s33, 3
      %p147 = scmp.ne.s32.totalorder %s142, %s144
      %p148 = scmp.eq.s32.totalorder %s33, 0
      %p149 = por %p147, %p148
      %p150 = scmp.ne.s32.totalorder %s142, %s144
      %p151 = scmp.eq.s32.totalorder %s38, 3
      %p152 = por %p150, %p151
      %p153 = scmp.ne.s32.totalorder %s144, %s145
      %p154 = scmp.eq.s32.totalorder %s38, 0
      %p155 = por %p153, %p154
      %p156 = scmp.ne.s32.totalorder %s144, %s145
      %p157 = scmp.eq.s32.totalorder %s39, 3
      %p158 = por %p156, %p157
      %p160 = scmp.ne.s32.totalorder %s145, %s159
      %p161 = scmp.eq.s32.totalorder %s39, 0
      %p162 = por %p160, %p161
      %s163 = ssub.s32 %s41, %s48
      %p164 = scmp.eq.s32.totalorder %s163, 0
      %s166 = sadd.s32 %s165, 1
      %s167 = scalar_select %p164, %s165, %s166
      %p170 = pneg %p164
      %p171 = scmp.eq.s32.totalorder %s33, 3
      %p172 = por %p170, %p171
      %p173 = scmp.ne.s32.totalorder %s165, %s168
      %p174 = scmp.eq.s32.totalorder %s33, 0
      %p175 = por %p173, %p174
      %p176 = scmp.ne.s32.totalorder %s165, %s168
      %p177 = scmp.eq.s32.totalorder %s38, 3
      %p178 = por %p176, %p177
      %p179 = scmp.ne.s32.totalorder %s168, %s169
      %p180 = scmp.eq.s32.totalorder %s38, 0
      %p181 = por %p179, %p180
      %p182 = scmp.ne.s32.totalorder %s168, %s169
      %p183 = scmp.eq.s32.totalorder %s39, 3
      %p184 = por %p182, %p183
      %p186 = scmp.ne.s32.totalorder %s169, %s185
      %p187 = scmp.eq.s32.totalorder %s39, 0
      %p188 = por %p186, %p187
      %s189 = ssub.s32 %s41, %s48
      %p190 = scmp.eq.s32.totalorder %s189, 0
      %s192 = sadd.s32 %s191, 1
      %s193 = scalar_select %p190, %s191, %s192
      %p196 = pneg %p190
      %p197 = scmp.eq.s32.totalorder %s33, 3
      %p198 = por %p196, %p197
      %p199 = scmp.ne.s32.totalorder %s191, %s194
      %p200 = scmp.eq.s32.totalorder %s33, 0
      %p201 = por %p199, %p200
      %p202 = scmp.ne.s32.totalorder %s191, %s194
      %p203 = scmp.eq.s32.totalorder %s38, 3
      %p204 = por %p202, %p203
      %p205 = scmp.ne.s32.totalorder %s194, %s195
      %p206 = scmp.eq.s32.totalorder %s38, 0
      %p207 = por %p205, %p206
      %p208 = scmp.ne.s32.totalorder %s194, %s195
      %p209 = scmp.eq.s32.totalorder %s39, 3
      %p210 = por %p208, %p209
      %p212 = scmp.ne.s32.totalorder %s195, %s211
      %p213 = scmp.eq.s32.totalorder %s39, 0
      %p214 = por %p212, %p213
      %s215 = ssub.s32 %s41, %s48
      %p216 = scmp.eq.s32.totalorder %s215, 0
      %s218 = sadd.s32 %s217, 1
      %s219 = scalar_select %p216, %s217, %s218
      %p222 = pneg %p216
      %p223 = scmp.eq.s32.totalorder %s33, 3
      %p224 = por %p222, %p223
      %p225 = scmp.ne.s32.totalorder %s217, %s220
      %p226 = scmp.eq.s32.totalorder %s33, 0
      %p227 = por %p225, %p226
      %p228 = scmp.ne.s32.totalorder %s217, %s220
      %p229 = scmp.eq.s32.totalorder %s38, 3
      %p230 = por %p228, %p229
      %p231 = scmp.ne.s32.totalorder %s220, %s221
      %p232 = scmp.eq.s32.totalorder %s38, 0
      %p233 = por %p231, %p232
      %p234 = scmp.ne.s32.totalorder %s220, %s221
      %p235 = scmp.eq.s32.totalorder %s39, 3
      %p236 = por %p234, %p235
      %p238 = scmp.ne.s32.totalorder %s221, %s237
      %p239 = scmp.eq.s32.totalorder %s39, 0
      %p240 = por %p238, %p239
      %s241 = ssub.s32 %s41, %s48
      %p242 = scmp.eq.s32.totalorder %s241, 0
      %s244 = sadd.s32 %s243, 1
      %s245 = scalar_select %p242, %s243, %s244
      %p248 = pneg %p242
      %p249 = scmp.eq.s32.totalorder %s33, 3
      %p250 = por %p248, %p249
      %p251 = scmp.ne.s32.totalorder %s243, %s246
      %p252 = scmp.eq.s32.totalorder %s33, 0
      %p253 = por %p251, %p252
      %p254 = scmp.ne.s32.totalorder %s243, %s246
      %p255 = scmp.eq.s32.totalorder %s38, 3
      %p256 = por %p254, %p255
      %p257 = scmp.ne.s32.totalorder %s246, %s247
      %p258 = scmp.eq.s32.totalorder %s38, 0
      %p259 = por %p257, %p258
      %p260 = scmp.ne.s32.totalorder %s246, %s247
      %p261 = scmp.eq.s32.totalorder %s39, 3
      %p262 = por %p260, %p261
      %p264 = scmp.ne.s32.totalorder %s247, %s263
      %p265 = scmp.eq.s32.totalorder %s39, 0
      %p266 = por %p264, %p265
      %s267 = ssub.s32 %s41, %s48
      %p268 = scmp.eq.s32.totalorder %s267, 0
      %s270 = sadd.s32 %s269, 1
      %s271 = scalar_select %p268, %s269, %s270
      %p274 = pneg %p268
      %p275 = scmp.eq.s32.totalorder %s33, 3
      %p276 = por %p274, %p275
      %p277 = scmp.ne.s32.totalorder %s269, %s272
      %p278 = scmp.eq.s32.totalorder %s33, 0
      %p279 = por %p277, %p278
      %p280 = scmp.ne.s32.totalorder %s269, %s272
      %p281 = scmp.eq.s32.totalorder %s38, 3
      %p282 = por %p280, %p281
      %p283 = scmp.ne.s32.totalorder %s272, %s273
      %p284 = scmp.eq.s32.totalorder %s38, 0
      %p285 = por %p283, %p284
      %p286 = scmp.ne.s32.totalorder %s272, %s273
      %p287 = scmp.eq.s32.totalorder %s39, 3
      %p288 = por %p286, %p287
      %p290 = scmp.ne.s32.totalorder %s273, %s289
      %p291 = scmp.eq.s32.totalorder %s39, 0
      %p292 = por %p290, %p291
      %s293 = ssub.s32 %s40, %s52
      %p294 = scmp.eq.s32.totalorder %s293, 0
      %s296 = sadd.s32 %s295, 1
      %s297 = scalar_select %p294, %s295, %s296
      %p300 = pneg %p294
      %p301 = scmp.eq.s32.totalorder %s33, 3
      %p302 = por %p300, %p301
      %p303 = scmp.ne.s32.totalorder %s295, %s298
      %p304 = scmp.eq.s32.totalorder %s33, 0
      %p305 = por %p303, %p304
      %p306 = scmp.ne.s32.totalorder %s295, %s298
      %p307 = scmp.eq.s32.totalorder %s38, 3
      %p308 = por %p306, %p307
      %p309 = scmp.ne.s32.totalorder %s298, %s299
      %p310 = scmp.eq.s32.totalorder %s38, 0
      %p311 = por %p309, %p310
      %p312 = scmp.ne.s32.totalorder %s298, %s299
      %p313 = scmp.eq.s32.totalorder %s39, 3
      %p314 = por %p312, %p313
      %p316 = scmp.ne.s32.totalorder %s299, %s315
      %p317 = scmp.eq.s32.totalorder %s39, 0
      %p318 = por %p316, %p317
      %p319 = scmp.le.s32.totalorder 1, %s33
      %p320 = scmp.lt.s32.totalorder %s33, 5
      %p321 = pnand %p319, %p320
      %p322 = pneg %p321
      // Predicated region
      $region9: #{clip_backbone_forward.1} parent=5 // pred_check
        _
      $region10: #{clip_backbone_forward.1} parent=5 // pred_check_branch
        %324 = sbr.rel (%p321) target = $region12
      $region11: #{clip_backbone_forward.1} parent=5 // pred_region
        %s325 = ssub.s32 %s33, 1
        // Predicated region
        $region13: #{clip_backbone_forward.1} parent=11 // pred_check
          %p326 = pneg %p92
        $region14: #{clip_backbone_forward.1} parent=11 // pred_check_branch
          %328 = sbr.rel (%p326) target = $region16
        $region15: #{clip_backbone_forward.1} parent=11 // pred_region
          %s330 = ssub.s32 6144, 6144
          %331 = vsyncadd [#allocation7], %s330
          %s332 = sshll.u32 [#allocation6], 4
          %s333 = int_to_ptr.vmem [resolvable:$true] %s332
          %338 = dma.hbm_to_vmem [thread:$0]  %s1, 6144, %s333, [#allocation7], 64, 64, 4
        $region16: #{clip_backbone_forward.1} parent=11 // pred_fallthru
          _
        // Predicated region
        $region17: #{clip_backbone_forward.1} parent=11 // pred_check
          %p339 = pneg %p113
        $region18: #{clip_backbone_forward.1} parent=11 // pred_check_branch
          %341 = sbr.rel (%p339) target = $region20
        $region19: #{clip_backbone_forward.1} parent=11 // pred_region
          %s343 = ssub.s32 128, 128
          %344 = vsyncadd [#allocation7], %s343
          %s346 = sshll.u32 [#allocation8], 4
          %s347 = int_to_ptr.vmem [resolvable:$true] %s346
          %349 = dma.hbm_to_vmem [thread:$0]  %s2, 128, %s347, [#allocation7]
        $region20: #{clip_backbone_forward.1} parent=11 // pred_fallthru
          _
        // Predicated region
        $region21: #{clip_backbone_forward.1} parent=11 // pred_check
          %p350 = pneg %p134
        $region22: #{clip_backbone_forward.1} parent=11 // pred_check_branch
          %352 = sbr.rel (%p350) target = $region24
        $region23: #{clip_backbone_forward.1} parent=11 // pred_region
          %s354 = ssub.s32 64, 64
          %355 = vsyncadd [#allocation10], %s354
          %s357 = sshll.u32 [#allocation9], 4
          %s358 = int_to_ptr.vmem [resolvable:$true] %s357
          %360 = dma.hbm_to_vmem [thread:$0]  %s3, 64, %s358, [#allocation10]
        $region24: #{clip_backbone_forward.1} parent=11 // pred_fallthru
          _
        // Predicated region
        $region25: #{clip_backbone_forward.1} parent=11 // pred_check
          %p361 = pneg %p155
        $region26: #{clip_backbone_forward.1} parent=11 // pred_check_branch
          %363 = sbr.rel (%p361) target = $region28
        $region27: #{clip_backbone_forward.1} parent=11 // pred_region
          %s365 = ssub.s32 512, 512
          %366 = vsyncadd [#allocation10], %s365
          %s367 = sshll.u32 [#allocation11], 4
          %s368 = int_to_ptr.vmem [resolvable:$true] %s367
          %373 = dma.hbm_to_vmem [thread:$0]  %s4, 512, %s368, [#allocation10], 64, 64, 4
        $region28: #{clip_backbone_forward.1} parent=11 // pred_fallthru
          _
      $region12: #{clip_backbone_forward.1} parent=5 // pred_fallthru
        _
      %p374 = scmp.lt.s32.totalorder %s33, 4
      // Predicated region
      $region29: #{clip_backbone_forward.1} parent=5 // pred_check
        %p375 = pneg %p374
      $region30: #{clip_backbone_forward.1} parent=5 // pred_check_branch
        %377 = sbr.rel (%p375) target = $region32
      $region31: #{clip_backbone_forward.1} parent=5 // pred_region
        // Predicated region
        $region33: #{clip_backbone_forward.1} parent=31 // pred_check
          %p378 = pneg %p65
        $region34: #{clip_backbone_forward.1} parent=31 // pred_check_branch
          %380 = sbr.rel (%p378) target = $region36
        $region35: #{clip_backbone_forward.1} parent=31 // pred_region
          %s381 = sand.u32 %s55, 1
          %s382 = scalar_lea.sflag [#allocation4], %s381
          %s383 = sand.u32 %s55, 1
          %s384 = smul.addr %s383, 12
          %s385 = scalar_lea.vmem [#allocation3], %s384
          %s387 = ssub.s32 192, 192
          %388 = vsyncadd %s382, %s387
          %s389 = smul.addr %s40, 6
          %s390 = smul.addr %s389, 32
          %s391 = scalar_lea.hbm %s0, %s390
          %s393 = sshll.u32 %s385, 4
          %s394 = int_to_ptr.vmem [resolvable:$true] %s393
          %396 = dma.hbm_to_vmem [thread:$0]  %s391, 192, %s394, %s382
        $region36: #{clip_backbone_forward.1} parent=31 // pred_fallthru
          _
        // Predicated region
        $region37: #{clip_backbone_forward.1} parent=31 // pred_check
          %p397 = pneg %p175
        $region38: #{clip_backbone_forward.1} parent=31 // pred_check_branch
          %399 = sbr.rel (%p397) target = $region40
        $region39: #{clip_backbone_forward.1} parent=31 // pred_region
          %s400 = sand.u32 %s33, 1
          %s401 = scalar_lea.sflag [#allocation13], %s400
          %s402 = sand.u32 %s165, 1
          %s403 = smul.addr %s402, 64
          %s404 = scalar_lea.vmem [#allocation12], %s403
          %s406 = ssub.s32 1024, 1024
          %407 = vsyncadd %s401, %s406
          %s408 = smul.addr %s41, 16
          %s409 = smul.addr %s408, 64
          %s410 = scalar_lea.hbm %s5, %s409
          %s411 = sshll.u32 %s404, 4
          %s412 = int_to_ptr.vmem [resolvable:$true] %s411
          %417 = dma.hbm_to_vmem [thread:$0]  %s410, 1024, %s412, %s401, 128, 128, 8
        $region40: #{clip_backbone_forward.1} parent=31 // pred_fallthru
          _
        // Predicated region
        $region41: #{clip_backbone_forward.1} parent=31 // pred_check
          %p418 = pneg %p201
        $region42: #{clip_backbone_forward.1} parent=31 // pred_check_branch
          %420 = sbr.rel (%p418) target = $region44
        $region43: #{clip_backbone_forward.1} parent=31 // pred_region
          %s421 = sand.u32 %s33, 1
          %s422 = scalar_lea.sflag [#allocation13], %s421
          %s423 = sand.u32 %s191, 1
          %s424 = smul.addr %s423, 32
          %s425 = scalar_lea.vmem [#allocation14], %s424
          %s427 = ssub.s32 512, 512
          %428 = vsyncadd %s422, %s427
          %s429 = smul.addr %s41, 8
          %s430 = smul.addr %s429, 64
          %s431 = scalar_lea.hbm %s6, %s430
          %s432 = sshll.u32 %s425, 4
          %s433 = int_to_ptr.vmem [resolvable:$true] %s432
          %438 = dma.hbm_to_vmem [thread:$0]  %s431, 512, %s433, %s422, 64, 64, 4
        $region44: #{clip_backbone_forward.1} parent=31 // pred_fallthru
          _
        // Predicated region
        $region45: #{clip_backbone_forward.1} parent=31 // pred_check
          %p439 = pneg %p227
        $region46: #{clip_backbone_forward.1} parent=31 // pred_check_branch
          %441 = sbr.rel (%p439) target = $region48
        $region47: #{clip_backbone_forward.1} parent=31 // pred_region
          %s442 = sand.u32 %s33, 1
          %s443 = scalar_lea.sflag [#allocation16], %s442
          %s444 = sand.u32 %s217, 1
          %s445 = smul.addr %s444, 64
          %s446 = scalar_lea.vmem [#allocation15], %s445
          %s448 = ssub.s32 1024, 1024
          %449 = vsyncadd %s443, %s448
          %s450 = smul.addr %s41, 16
          %s451 = smul.addr %s450, 64
          %s452 = scalar_lea.hbm %s7, %s451
          %s453 = sshll.u32 %s446, 4
          %s454 = int_to_ptr.vmem [resolvable:$true] %s453
          %459 = dma.hbm_to_vmem [thread:$0]  %s452, 1024, %s454, %s443, 128, 128, 8
        $region48: #{clip_backbone_forward.1} parent=31 // pred_fallthru
          _
        // Predicated region
        $region49: #{clip_backbone_forward.1} parent=31 // pred_check
          %p460 = pneg %p253
        $region50: #{clip_backbone_forward.1} parent=31 // pred_check_branch
          %462 = sbr.rel (%p460) target = $region52
        $region51: #{clip_backbone_forward.1} parent=31 // pred_region
          %s463 = sand.u32 %s33, 1
          %s464 = scalar_lea.sflag [#allocation16], %s463
          %s465 = sand.u32 %s243, 1
          %s466 = smul.addr %s465, 128
          %s467 = scalar_lea.vmem [#allocation17], %s466
          %s469 = ssub.s32 2048, 2048
          %470 = vsyncadd %s464, %s469
          %s471 = smul.addr %s41, 32
          %s472 = smul.addr %s471, 64
          %s473 = scalar_lea.hbm %s8, %s472
          %s474 = sshll.u32 %s467, 4
          %s475 = int_to_ptr.vmem [resolvable:$true] %s474
          %480 = dma.hbm_to_vmem [thread:$0]  %s473, 2048, %s475, %s464, 64, 64, 4
        $region52: #{clip_backbone_forward.1} parent=31 // pred_fallthru
          _
        // Predicated region
        $region53: #{clip_backbone_forward.1} parent=31 // pred_check
          %p481 = pneg %p279
        $region54: #{clip_backbone_forward.1} parent=31 // pred_check_branch
          %483 = sbr.rel (%p481) target = $region56
        $region55: #{clip_backbone_forward.1} parent=31 // pred_region
          %s484 = sand.u32 %s269, 1
          %s485 = scalar_lea.sflag [#allocation19], %s484
          %s486 = sand.u32 %s269, 1
          %s487 = smul.addr %s486, 16
          %s488 = scalar_lea.vmem [#allocation18], %s487
          %s490 = ssub.s32 256, 256
          %491 = vsyncadd %s485, %s490
          %s492 = smul.addr %s41, 2
          %s493 = smul.addr %s492, 128
          %s494 = scalar_lea.hbm %s9, %s493
          %s496 = sshll.u32 %s488, 4
          %s497 = int_to_ptr.vmem [resolvable:$true] %s496
          %499 = dma.hbm_to_vmem [thread:$0]  %s494, 256, %s497, %s485
        $region56: #{clip_backbone_forward.1} parent=31 // pred_fallthru
          _
      $region32: #{clip_backbone_forward.1} parent=5 // pred_fallthru
        _
      %p500 = scmp.le.s32.totalorder 1, %s33
      %p501 = scmp.lt.s32.totalorder %s33, 5
      %p502 = pnand %p500, %p501
      %p503 = pneg %p502
      // Predicated region
      $region57: #{clip_backbone_forward.1} parent=5 // pred_check
        _
      $region58: #{clip_backbone_forward.1} parent=5 // pred_check_branch
        %505 = sbr.rel (%p502) target = $region60
      $region59: #{clip_backbone_forward.1} parent=5 // pred_region
        %s506 = ssub.s32 %s33, 1
        %s507 = sand.u32 %s58, 1
        %s508 = scalar_lea.sflag [#allocation4], %s507
        %s509 = sand.u32 %s58, 1
        %s510 = smul.addr %s509, 12
        %s511 = scalar_lea.vmem [#allocation3], %s510
        // Predicated region
        $region61: #{clip_backbone_forward.1} parent=59 // pred_check
          %p512 = pneg %p71
        $region62: #{clip_backbone_forward.1} parent=59 // pred_check_branch
          %514 = sbr.rel (%p512) target = $region64
        $region63: #{clip_backbone_forward.1} parent=59 // pred_region
          %515 = dma.done %s508, 192
        $region64: #{clip_backbone_forward.1} parent=59 // pred_fallthru
          _
        // Predicated region
        $region65: #{clip_backbone_forward.1} parent=59 // pred_check
          %p516 = pneg %p92
        $region66: #{clip_backbone_forward.1} parent=59 // pred_check_branch
          %518 = sbr.rel (%p516) target = $region68
        $region67: #{clip_backbone_forward.1} parent=59 // pred_region
          %519 = dma.done [#allocation7], 6144
        $region68: #{clip_backbone_forward.1} parent=59 // pred_fallthru
          _
        // Predicated region
        $region69: #{clip_backbone_forward.1} parent=59 // pred_check
          %p520 = pneg %p113
        $region70: #{clip_backbone_forward.1} parent=59 // pred_check_branch
          %522 = sbr.rel (%p520) target = $region72
        $region71: #{clip_backbone_forward.1} parent=59 // pred_region
          %523 = dma.done [#allocation7], 128
        $region72: #{clip_backbone_forward.1} parent=59 // pred_fallthru
          _
        // Predicated region
        $region73: #{clip_backbone_forward.1} parent=59 // pred_check
          %p524 = pneg %p134
        $region74: #{clip_backbone_forward.1} parent=59 // pred_check_branch
          %526 = sbr.rel (%p524) target = $region76
        $region75: #{clip_backbone_forward.1} parent=59 // pred_region
          %527 = dma.done [#allocation10], 64
        $region76: #{clip_backbone_forward.1} parent=59 // pred_fallthru
          _
        // Predicated region
        $region77: #{clip_backbone_forward.1} parent=59 // pred_check
          %p528 = pneg %p155
        $region78: #{clip_backbone_forward.1} parent=59 // pred_check_branch
          %530 = sbr.rel (%p528) target = $region80
        $region79: #{clip_backbone_forward.1} parent=59 // pred_region
          %531 = dma.done [#allocation10], 512
        $region80: #{clip_backbone_forward.1} parent=59 // pred_fallthru
          _
        %s532 = sand.u32 %s38, 1
        %s533 = scalar_lea.sflag [#allocation13], %s532
        %s534 = sand.u32 %s168, 1
        %s535 = smul.addr %s534, 64
        %s536 = scalar_lea.vmem [#allocation12], %s535
        // Predicated region
        $region81: #{clip_backbone_forward.1} parent=59 // pred_check
          %p537 = pneg %p181
        $region82: #{clip_backbone_forward.1} parent=59 // pred_check_branch
          %539 = sbr.rel (%p537) target = $region84
        $region83: #{clip_backbone_forward.1} parent=59 // pred_region
          %540 = dma.done %s533, 1024
        $region84: #{clip_backbone_forward.1} parent=59 // pred_fallthru
          _
        %s541 = sand.u32 %s38, 1
        %s542 = scalar_lea.sflag [#allocation13], %s541
        %s543 = sand.u32 %s194, 1
        %s544 = smul.addr %s543, 32
        %s545 = scalar_lea.vmem [#allocation14], %s544
        // Predicated region
        $region85: #{clip_backbone_forward.1} parent=59 // pred_check
          %p546 = pneg %p207
        $region86: #{clip_backbone_forward.1} parent=59 // pred_check_branch
          %548 = sbr.rel (%p546) target = $region88
        $region87: #{clip_backbone_forward.1} parent=59 // pred_region
          %549 = dma.done %s542, 512
        $region88: #{clip_backbone_forward.1} parent=59 // pred_fallthru
          _
        %s550 = sand.u32 %s38, 1
        %s551 = scalar_lea.sflag [#allocation16], %s550
        %s552 = sand.u32 %s220, 1
        %s553 = smul.addr %s552, 64
        %s554 = scalar_lea.vmem [#allocation15], %s553
        // Predicated region
        $region89: #{clip_backbone_forward.1} parent=59 // pred_check
          %p555 = pneg %p233
        $region90: #{clip_backbone_forward.1} parent=59 // pred_check_branch
          %557 = sbr.rel (%p555) target = $region92
        $region91: #{clip_backbone_forward.1} parent=59 // pred_region
          %558 = dma.done %s551, 1024
        $region92: #{clip_backbone_forward.1} parent=59 // pred_fallthru
          _
        %s559 = sand.u32 %s38, 1
        %s560 = scalar_lea.sflag [#allocation16], %s559
        %s561 = sand.u32 %s246, 1
        %s562 = smul.addr %s561, 128
        %s563 = scalar_lea.vmem [#allocation17], %s562
        // Predicated region
        $region93: #{clip_backbone_forward.1} parent=59 // pred_check
          %p564 = pneg %p259
        $region94: #{clip_backbone_forward.1} parent=59 // pred_check_branch
          %566 = sbr.rel (%p564) target = $region96
        $region95: #{clip_backbone_forward.1} parent=59 // pred_region
          %567 = dma.done %s560, 2048
        $region96: #{clip_backbone_forward.1} parent=59 // pred_fallthru
          _
        %s568 = sand.u32 %s272, 1
        %s569 = scalar_lea.sflag [#allocation19], %s568
        %s570 = sand.u32 %s272, 1
        %s571 = smul.addr %s570, 16
        %s572 = scalar_lea.vmem [#allocation18], %s571
        // Predicated region
        $region97: #{clip_backbone_forward.1} parent=59 // pred_check
          %p573 = pneg %p285
        $region98: #{clip_backbone_forward.1} parent=59 // pred_check_branch
          %575 = sbr.rel (%p573) target = $region100
        $region99: #{clip_backbone_forward.1} parent=59 // pred_region
          %576 = dma.done %s569, 256
        $region100: #{clip_backbone_forward.1} parent=59 // pred_fallthru
          _
        %s577 = sand.u32 %s58, 1
        %s578 = scalar_lea.sflag [#allocation4], %s577
        %s579 = sand.u32 %s58, 1
        %s580 = smul.addr %s579, 12
        %s581 = scalar_lea.vmem [#allocation3], %s580
        %p582 = pneg %p71
        %p583 = pneg %p68
        %p584 = pneg %p92
        %p585 = pneg %p89
        %p586 = pneg %p113
        %p587 = pneg %p110
        %p588 = pneg %p134
        %p589 = pneg %p131
        %p590 = pneg %p155
        %p591 = pneg %p152
        %s592 = sand.u32 %s38, 1
        %s593 = scalar_lea.sflag [#allocation13], %s592
        %s594 = sand.u32 %s168, 1
        %s595 = smul.addr %s594, 64
        %s596 = scalar_lea.vmem [#allocation12], %s595
        %p597 = pneg %p181
        %p598 = pneg %p178
        %s599 = sand.u32 %s38, 1
        %s600 = scalar_lea.sflag [#allocation13], %s599
        %s601 = sand.u32 %s194, 1
        %s602 = smul.addr %s601, 32
        %s603 = scalar_lea.vmem [#allocation14], %s602
        %p604 = pneg %p207
        %p605 = pneg %p204
        %s606 = sand.u32 %s38, 1
        %s607 = scalar_lea.sflag [#allocation16], %s606
        %s608 = sand.u32 %s220, 1
        %s609 = smul.addr %s608, 64
        %s610 = scalar_lea.vmem [#allocation15], %s609
        %p611 = pneg %p233
        %p612 = pneg %p230
        %s613 = sand.u32 %s38, 1
        %s614 = scalar_lea.sflag [#allocation16], %s613
        %s615 = sand.u32 %s246, 1
        %s616 = smul.addr %s615, 128
        %s617 = scalar_lea.vmem [#allocation17], %s616
        %p618 = pneg %p259
        %p619 = pneg %p256
        %s620 = sand.u32 %s272, 1
        %s621 = scalar_lea.sflag [#allocation19], %s620
        %s622 = sand.u32 %s272, 1
        %s623 = smul.addr %s622, 16
        %s624 = scalar_lea.vmem [#allocation18], %s623
        %p625 = pneg %p285
        %p626 = pneg %p282
        %p627 = pneg %p311
        %p628 = pneg %p308
        %s629 = sand.u32 %s298, 1
        %s630 = scalar_lea.sflag [#allocation5], %s629
        %s631 = sand.u32 %s298, 1
        %s632 = scalar_lea.vmem [#allocation20], %s631
        %p634 = scmp.eq.s32.totalorder %s43, 0
        // Predicated region
        $region101: #{clip_backbone_forward.1} parent=59 // pred_check
          %p635 = pneg %p634
        $region102: #{clip_backbone_forward.1} parent=59 // pred_check_branch
          %637 = sbr.rel (%p635) target = $region104
        $region103: #{clip_backbone_forward.1} parent=59 // pred_region
          %v638 = vld [vmem:[%s511] sm:$0xff]
          %v639 = vld [vmem:[%s511 + $0x8] sm:$0xf]
          %v640 = vld [vmem:[#allocation6] sm:$0xf]
          %v641 = vld [vmem:[#allocation6 + $0x4] sm:$0xf]
          %v642 = vld [vmem:[#allocation6 + $0x8] sm:$0xf]
          %v643 = vld [vmem:[#allocation6 + $0xc] sm:$0xf]
          %v644 = vld [vmem:[#allocation6 + $0x10] sm:$0xf]
          %v645 = vld [vmem:[#allocation6 + $0x14] sm:$0xf]
          %v646 = vld [vmem:[#allocation6 + $0x18] sm:$0xf]
          %v647 = vld [vmem:[#allocation6 + $0x1c] sm:$0xf]
          %v648 = vld [vmem:[#allocation6 + $0x20] sm:$0xf]
          %v649 = vld [vmem:[#allocation6 + $0x24] sm:$0xf]
          %v650 = vld [vmem:[#allocation6 + $0x28] sm:$0xf]
          %v651 = vld [vmem:[#allocation6 + $0x2c] sm:$0xf]
          %v652 = vld [vmem:[#allocation6 + $0x30] sm:$0xf]
          %v653 = vld [vmem:[#allocation6 + $0x34] sm:$0xf]
          %v654 = vld [vmem:[#allocation6 + $0x38] sm:$0xf]
          %v655 = vld [vmem:[#allocation6 + $0x3c] sm:$0xf]
          %v656 = vld [vmem:[#allocation6 + $0x40] sm:$0xf]
          %v657 = vld [vmem:[#allocation6 + $0x44] sm:$0xf]
          %v658 = vld [vmem:[#allocation6 + $0x48] sm:$0xf]
          %v659 = vld [vmem:[#allocation6 + $0x4c] sm:$0xf]
          %v660 = vld [vmem:[#allocation6 + $0x50] sm:$0xf]
          %v661 = vld [vmem:[#allocation6 + $0x54] sm:$0xf]
          %v662 = vld [vmem:[#allocation6 + $0x58] sm:$0xf]
          %v663 = vld [vmem:[#allocation6 + $0x5c] sm:$0xf]
          %v664 = vld [vmem:[#allocation6 + $0x60] sm:$0xf]
          %v665 = vld [vmem:[#allocation6 + $0x64] sm:$0xf]
          %v666 = vld [vmem:[#allocation6 + $0x68] sm:$0xf]
          %v667 = vld [vmem:[#allocation6 + $0x6c] sm:$0xf]
          %v668 = vld [vmem:[#allocation6 + $0x70] sm:$0xf]
          %v669 = vld [vmem:[#allocation6 + $0x74] sm:$0xf]
          %v670 = vld [vmem:[#allocation6 + $0x78] sm:$0xf]
          %v671 = vld [vmem:[#allocation6 + $0x7c] sm:$0xf]
          %v672 = vld [vmem:[#allocation6 + $0x80] sm:$0xf]
          %v673 = vld [vmem:[#allocation6 + $0x84] sm:$0xf]
          %v674 = vld [vmem:[#allocation6 + $0x88] sm:$0xf]
          %v675 = vld [vmem:[#allocation6 + $0x8c] sm:$0xf]
          %v676 = vld [vmem:[#allocation6 + $0x90] sm:$0xf]
          %v677 = vld [vmem:[#allocation6 + $0x94] sm:$0xf]
          %v678 = vld [vmem:[#allocation6 + $0x98] sm:$0xf]
          %v679 = vld [vmem:[#allocation6 + $0x9c] sm:$0xf]
          %v680 = vld [vmem:[#allocation6 + $0xa0] sm:$0xf]
          %v681 = vld [vmem:[#allocation6 + $0xa4] sm:$0xf]
          %v682 = vld [vmem:[#allocation6 + $0xa8] sm:$0xf]
          %v683 = vld [vmem:[#allocation6 + $0xac] sm:$0xf]
          %v684 = vld [vmem:[#allocation6 + $0xb0] sm:$0xf]
          %v685 = vld [vmem:[#allocation6 + $0xb4] sm:$0xf]
          %v686 = vld [vmem:[#allocation6 + $0xb8] sm:$0xf]
          %v687 = vld [vmem:[#allocation6 + $0xbc] sm:$0xf]
          %v688 = vld [vmem:[#allocation6 + $0xc0] sm:$0xf]
          %v689 = vld [vmem:[#allocation6 + $0xc4] sm:$0xf]
          %v690 = vld [vmem:[#allocation6 + $0xc8] sm:$0xf]
          %v691 = vld [vmem:[#allocation6 + $0xcc] sm:$0xf]
          %v692 = vld [vmem:[#allocation6 + $0xd0] sm:$0xf]
          %v693 = vld [vmem:[#allocation6 + $0xd4] sm:$0xf]
          %v694 = vld [vmem:[#allocation6 + $0xd8] sm:$0xf]
          %v695 = vld [vmem:[#allocation6 + $0xdc] sm:$0xf]
          %v696 = vld [vmem:[#allocation6 + $0xe0] sm:$0xf]
          %v697 = vld [vmem:[#allocation6 + $0xe4] sm:$0xf]
          %v698 = vld [vmem:[#allocation6 + $0xe8] sm:$0xf]
          %v699 = vld [vmem:[#allocation6 + $0xec] sm:$0xf]
          %v700 = vld [vmem:[#allocation6 + $0xf0] sm:$0xf]
          %v701 = vld [vmem:[#allocation6 + $0xf4] sm:$0xf]
          %v702 = vld [vmem:[#allocation6 + $0xf8] sm:$0xf]
          %v703 = vld [vmem:[#allocation6 + $0xfc] sm:$0xf]
          %v704 = vld [vmem:[#allocation6 + $0x100] sm:$0xf]
          %v705 = vld [vmem:[#allocation6 + $0x104] sm:$0xf]
          %v706 = vld [vmem:[#allocation6 + $0x108] sm:$0xf]
          %v707 = vld [vmem:[#allocation6 + $0x10c] sm:$0xf]
          %v708 = vld [vmem:[#allocation6 + $0x110] sm:$0xf]
          %v709 = vld [vmem:[#allocation6 + $0x114] sm:$0xf]
          %v710 = vld [vmem:[#allocation6 + $0x118] sm:$0xf]
          %v711 = vld [vmem:[#allocation6 + $0x11c] sm:$0xf]
          %v712 = vld [vmem:[#allocation6 + $0x120] sm:$0xf]
          %v713 = vld [vmem:[#allocation6 + $0x124] sm:$0xf]
          %v714 = vld [vmem:[#allocation6 + $0x128] sm:$0xf]
          %v715 = vld [vmem:[#allocation6 + $0x12c] sm:$0xf]
          %v716 = vld [vmem:[#allocation6 + $0x130] sm:$0xf]
          %v717 = vld [vmem:[#allocation6 + $0x134] sm:$0xf]
          %v718 = vld [vmem:[#allocation6 + $0x138] sm:$0xf]
          %v719 = vld [vmem:[#allocation6 + $0x13c] sm:$0xf]
          %v720 = vld [vmem:[#allocation6 + $0x140] sm:$0xf]
          %v721 = vld [vmem:[#allocation6 + $0x144] sm:$0xf]
          %v722 = vld [vmem:[#allocation6 + $0x148] sm:$0xf]
          %v723 = vld [vmem:[#allocation6 + $0x14c] sm:$0xf]
          %v724 = vld [vmem:[#allocation6 + $0x150] sm:$0xf]
          %v725 = vld [vmem:[#allocation6 + $0x154] sm:$0xf]
          %v726 = vld [vmem:[#allocation6 + $0x158] sm:$0xf]
          %v727 = vld [vmem:[#allocation6 + $0x15c] sm:$0xf]
          %v728 = vld [vmem:[#allocation6 + $0x160] sm:$0xf]
          %v729 = vld [vmem:[#allocation6 + $0x164] sm:$0xf]
          %v730 = vld [vmem:[#allocation6 + $0x168] sm:$0xf]
          %v731 = vld [vmem:[#allocation6 + $0x16c] sm:$0xf]
          %v732 = vld [vmem:[#allocation6 + $0x170] sm:$0xf]
          %v733 = vld [vmem:[#allocation6 + $0x174] sm:$0xf]
          %v734 = vld [vmem:[#allocation6 + $0x178] sm:$0xf]
          %v735 = vld [vmem:[#allocation6 + $0x17c] sm:$0xf]
          %v738 = vcombine.high %v638, %v638
          %v740 = vunpack.c.l.s4 1983009808
          %v741 = vunpack.c.0.s8 %v740
          %v742 = vlaneseq
          %v743 = vshrl.u32 %v742, 7
          %v744 = vsub.s32 %v741, %v743
          %v745 = vrot.slane %v638, %v744
          %v747 = vunpack.c.l.s4 1983009808
          %v748 = vunpack.c.0.s8 %v747
          %v749 = vlaneseq
          %v750 = vshrl.u32 %v749, 7
          %v751 = vsub.s32 %v748, %v750
          %v752 = vrot.slane %v738, %v751
          %v753 = vcombine.high %v745, %v745
          %v754 = vcombine.high %v752, %v752
          %v756 = vunpack.c.l.s4 1983009808
          %v757 = vunpack.c.0.s8 %v756
          %v758 = vlaneseq
          %v759 = vshrl.u32 %v758, 7
          %v760 = vsub.s32 %v757, %v759
          %v761 = vrot.slane %v639, %v760
          %v762 = vcombine.high %v761, %v761
          %v865 = vunpack.c.l.b16 %v640
          %v866 = vunpack.c.l.b16 %v641
          %v867 = vunpack.c.l.b16 %v642
          %v868 = vunpack.c.l.b16 %v643
          %v869 = vunpack.c.l.b16 %v644
          %v870 = vunpack.c.l.b16 %v645
          %v871 = vunpack.c.l.b16 %v646
          %v872 = vunpack.c.l.b16 %v647
          %v873 = vunpack.c.l.b16 %v648
          %v874 = vunpack.c.l.b16 %v649
          %v875 = vunpack.c.l.b16 %v650
          %v876 = vunpack.c.l.b16 %v651
          %v877 = vunpack.c.l.b16 %v652
          %v878 = vunpack.c.l.b16 %v653
          %v879 = vunpack.c.l.b16 %v654
          %v880 = vunpack.c.l.b16 %v655
          %v881 = vunpack.c.l.b16 %v656
          %v882 = vunpack.c.l.b16 %v657
          %v883 = vunpack.c.l.b16 %v658
          %v884 = vunpack.c.l.b16 %v659
          %v885 = vunpack.c.l.b16 %v660
          %v886 = vunpack.c.l.b16 %v661
          %v887 = vunpack.c.l.b16 %v662
          %v888 = vunpack.c.l.b16 %v663
          %v889 = vunpack.c.l.b16 %v664
          %v890 = vunpack.c.l.b16 %v665
          %v891 = vunpack.c.l.b16 %v666
          %v892 = vunpack.c.l.b16 %v667
          %v893 = vunpack.c.l.b16 %v668
          %v894 = vunpack.c.l.b16 %v669
          %v895 = vunpack.c.l.b16 %v670
          %v896 = vunpack.c.l.b16 %v671
          %v897 = vunpack.c.l.b16 %v672
          %v898 = vunpack.c.l.b16 %v673
          %v899 = vunpack.c.l.b16 %v674
          %v900 = vunpack.c.l.b16 %v675
          %v901 = vunpack.c.l.b16 %v676
          %v902 = vunpack.c.l.b16 %v677
          %v903 = vunpack.c.l.b16 %v678
          %v904 = vunpack.c.l.b16 %v679
          %v905 = vunpack.c.l.b16 %v680
          %v906 = vunpack.c.l.b16 %v681
          %v907 = vunpack.c.l.b16 %v682
          %v908 = vunpack.c.l.b16 %v683
          %v909 = vunpack.c.l.b16 %v684
          %v910 = vunpack.c.l.b16 %v685
          %v911 = vunpack.c.l.b16 %v686
          %v912 = vunpack.c.l.b16 %v687
          %v913 = vunpack.c.l.b16 %v688
          %v914 = vunpack.c.l.b16 %v689
          %v915 = vunpack.c.l.b16 %v690
          %v916 = vunpack.c.l.b16 %v691
          %v917 = vunpack.c.l.b16 %v692
          %v918 = vunpack.c.l.b16 %v693
          %v919 = vunpack.c.l.b16 %v694
          %v920 = vunpack.c.l.b16 %v695
          %v921 = vunpack.c.l.b16 %v696
          %v922 = vunpack.c.l.b16 %v697
          %v923 = vunpack.c.l.b16 %v698
          %v924 = vunpack.c.l.b16 %v699
          %v925 = vunpack.c.l.b16 %v700
          %v926 = vunpack.c.l.b16 %v701
          %v927 = vunpack.c.l.b16 %v702
          %v928 = vunpack.c.l.b16 %v703
          %v929 = vunpack.c.l.b16 %v704
          %v930 = vunpack.c.l.b16 %v705
          %v931 = vunpack.c.l.b16 %v706
          %v932 = vunpack.c.l.b16 %v707
          %v933 = vunpack.c.l.b16 %v708
          %v934 = vunpack.c.l.b16 %v709
          %v935 = vunpack.c.l.b16 %v710
          %v936 = vunpack.c.l.b16 %v711
          %v937 = vunpack.c.l.b16 %v712
          %v938 = vunpack.c.l.b16 %v713
          %v939 = vunpack.c.l.b16 %v714
          %v940 = vunpack.c.l.b16 %v715
          %v941 = vunpack.c.l.b16 %v716
          %v942 = vunpack.c.l.b16 %v717
          %v943 = vunpack.c.l.b16 %v718
          %v944 = vunpack.c.l.b16 %v719
          %v945 = vunpack.c.l.b16 %v720
          %v946 = vunpack.c.l.b16 %v721
          %v947 = vunpack.c.l.b16 %v722
          %v948 = vunpack.c.l.b16 %v723
          %v949 = vunpack.c.l.b16 %v724
          %v950 = vunpack.c.l.b16 %v725
          %v951 = vunpack.c.l.b16 %v726
          %v952 = vunpack.c.l.b16 %v727
          %v953 = vunpack.c.l.b16 %v728
          %v954 = vunpack.c.l.b16 %v729
          %v955 = vunpack.c.l.b16 %v730
          %v956 = vunpack.c.l.b16 %v731
          %v957 = vunpack.c.l.b16 %v732
          %v958 = vunpack.c.l.b16 %v733
          %v959 = vunpack.c.l.b16 %v734
          %v960 = vunpack.c.l.b16 %v735
          %v961 = vpack.c.b16 %v866, %v865
          %v962 = vpack.c.b16 %v868, %v867
          %v963 = vpack.c.b16 %v870, %v869
          %v964 = vpack.c.b16 %v872, %v871
          %v965 = vpack.c.b16 %v874, %v873
          %v966 = vpack.c.b16 %v876, %v875
          %v967 = vpack.c.b16 %v878, %v877
          %v968 = vpack.c.b16 %v880, %v879
          %v969 = vpack.c.b16 %v882, %v881
          %v970 = vpack.c.b16 %v884, %v883
          %v971 = vpack.c.b16 %v886, %v885
          %v972 = vpack.c.b16 %v888, %v887
          %v973 = vpack.c.b16 %v890, %v889
          %v974 = vpack.c.b16 %v892, %v891
          %v975 = vpack.c.b16 %v894, %v893
          %v976 = vpack.c.b16 %v896, %v895
          %v977 = vpack.c.b16 %v898, %v897
          %v978 = vpack.c.b16 %v900, %v899
          %v979 = vpack.c.b16 %v902, %v901
          %v980 = vpack.c.b16 %v904, %v903
          %v981 = vpack.c.b16 %v906, %v905
          %v982 = vpack.c.b16 %v908, %v907
          %v983 = vpack.c.b16 %v910, %v909
          %v984 = vpack.c.b16 %v912, %v911
          %v985 = vpack.c.b16 %v914, %v913
          %v986 = vpack.c.b16 %v916, %v915
          %v987 = vpack.c.b16 %v918, %v917
          %v988 = vpack.c.b16 %v920, %v919
          %v989 = vpack.c.b16 %v922, %v921
          %v990 = vpack.c.b16 %v924, %v923
          %v991 = vpack.c.b16 %v926, %v925
          %v992 = vpack.c.b16 %v928, %v927
          %v993 = vpack.c.b16 %v930, %v929
          %v994 = vpack.c.b16 %v932, %v931
          %v995 = vpack.c.b16 %v934, %v933
          %v996 = vpack.c.b16 %v936, %v935
          %v997 = vpack.c.b16 %v938, %v937
          %v998 = vpack.c.b16 %v940, %v939
          %v999 = vpack.c.b16 %v942, %v941
          %v1000 = vpack.c.b16 %v944, %v943
          %v1001 = vpack.c.b16 %v946, %v945
          %v1002 = vpack.c.b16 %v948, %v947
          %v1003 = vpack.c.b16 %v950, %v949
          %v1004 = vpack.c.b16 %v952, %v951
          %v1005 = vpack.c.b16 %v954, %v953
          %v1006 = vpack.c.b16 %v956, %v955
          %v1007 = vpack.c.b16 %v958, %v957
          %v1008 = vpack.c.b16 %v960, %v959
          %1057 = vmatprep.subr.bf16.mxu0 0
          %1058 = vmatpush1.bf16.msra.mxu0 %v961
          %1059 = vmatprep.subr.bf16.mxu0 0
          %1060 = vmatpush1.bf16.msra.mxu0 %v962
          %1061 = vmatprep.subr.bf16.mxu0 0
          %1062 = vmatpush1.bf16.msra.mxu0 %v963
          %1063 = vmatprep.subr.bf16.mxu0 0
          %1064 = vmatpush1.bf16.msra.mxu0 %v964
          %1065 = vmatprep.subr.bf16.mxu0 0
          %1066 = vmatpush1.bf16.msra.mxu0 %v965
          %1067 = vmatprep.subr.bf16.mxu0 0
          %1068 = vmatpush1.bf16.msra.mxu0 %v966
          %1069 = vmatprep.subr.bf16.mxu0 0
          %1070 = vmatpush1.bf16.msra.mxu0 %v967
          %1071 = vmatprep.subr.bf16.mxu0 0
          %1072 = vmatpush1.bf16.msra.mxu0 %v968
          %1073 = vmatprep.subr.bf16.mxu0 0
          %1074 = vmatpush1.bf16.msra.mxu0 %v969
          %1075 = vmatprep.subr.bf16.mxu0 0
          %1076 = vmatpush1.bf16.msra.mxu0 %v970
          %1077 = vmatprep.subr.bf16.mxu0 0
          %1078 = vmatpush1.bf16.msra.mxu0 %v971
          %1079 = vmatprep.subr.bf16.mxu0 0
          %1080 = vmatpush1.bf16.msra.mxu0 %v972
          %1081 = vmatprep.subr.bf16.mxu0 0
          %1082 = vmatpush1.bf16.msra.mxu0 %v973
          %1083 = vmatprep.subr.bf16.mxu0 0
          %1084 = vmatpush1.bf16.msra.mxu0 %v974
          %1085 = vmatprep.subr.bf16.mxu0 0
          %1086 = vmatpush1.bf16.msra.mxu0 %v975
          %1087 = vmatprep.subr.bf16.mxu0 0
          %1088 = vmatpush1.bf16.msra.mxu0 %v976
          %1089 = vmatprep.mubr.bf16.mxu0 %v753
          %1090 = vmatmul.mubr.bf16.gmra.mrb[0].mxu0 %v745
          %v1091 = vpop.f32.mrb[0].mxu0
          %v1092 = vadd.f32 0.0, %v1091
          %v1093 = vpop.f32.mrb[0].mxu0
          %v1094 = vpop.f32.mrb[0].mxu0
          %v1095 = vpop.f32.mrb[0].mxu0
          %1096 = vdwg.mxu0
          %1097 = vmatprep.subr.bf16.mxu0 0
          %1098 = vmatpush1.bf16.msra.mxu0 %v977
          %1099 = vmatprep.subr.bf16.mxu0 0
          %1100 = vmatpush1.bf16.msra.mxu0 %v978
          %1101 = vmatprep.subr.bf16.mxu0 0
          %1102 = vmatpush1.bf16.msra.mxu0 %v979
          %1103 = vmatprep.subr.bf16.mxu0 0
          %1104 = vmatpush1.bf16.msra.mxu0 %v980
          %1105 = vmatprep.subr.bf16.mxu0 0
          %1106 = vmatpush1.bf16.msra.mxu0 %v981
          %1107 = vmatprep.subr.bf16.mxu0 0
          %1108 = vmatpush1.bf16.msra.mxu0 %v982
          %1109 = vmatprep.subr.bf16.mxu0 0
          %1110 = vmatpush1.bf16.msra.mxu0 %v983
          %1111 = vmatprep.subr.bf16.mxu0 0
          %1112 = vmatpush1.bf16.msra.mxu0 %v984
          %1113 = vmatprep.subr.bf16.mxu0 0
          %1114 = vmatpush1.bf16.msra.mxu0 %v985
          %1115 = vmatprep.subr.bf16.mxu0 0
          %1116 = vmatpush1.bf16.msra.mxu0 %v986
          %1117 = vmatprep.subr.bf16.mxu0 0
          %1118 = vmatpush1.bf16.msra.mxu0 %v987
          %1119 = vmatprep.subr.bf16.mxu0 0
          %1120 = vmatpush1.bf16.msra.mxu0 %v988
          %1121 = vmatprep.subr.bf16.mxu0 0
          %1122 = vmatpush1.bf16.msra.mxu0 %v989
          %1123 = vmatprep.subr.bf16.mxu0 0
          %1124 = vmatpush1.bf16.msra.mxu0 %v990
          %1125 = vmatprep.subr.bf16.mxu0 0
          %1126 = vmatpush1.bf16.msra.mxu0 %v991
          %1127 = vmatprep.subr.bf16.mxu0 0
          %1128 = vmatpush1.bf16.msra.mxu0 %v992
          %1129 = vmatprep.mubr.bf16.mxu0 %v754
          %1130 = vmatmul.mubr.bf16.gmra.mrb[0].mxu0 %v752
          %v1131 = vpop.f32.mrb[0].mxu0
          %v1132 = vadd.f32 %v1092, %v1131
          %v1133 = vpop.f32.mrb[0].mxu0
          %v1134 = vpop.f32.mrb[0].mxu0
          %v1135 = vpop.f32.mrb[0].mxu0
          %1136 = vdwg.mxu0
          %1137 = vmatprep.subr.bf16.mxu0 0
          %1138 = vmatpush1.bf16.msra.mxu0 %v993
          %1139 = vmatprep.subr.bf16.mxu0 0
          %1140 = vmatpush1.bf16.msra.mxu0 %v994
          %1141 = vmatprep.subr.bf16.mxu0 0
          %1142 = vmatpush1.bf16.msra.mxu0 %v995
          %1143 = vmatprep.subr.bf16.mxu0 0
          %1144 = vmatpush1.bf16.msra.mxu0 %v996
          %1145 = vmatprep.subr.bf16.mxu0 0
          %1146 = vmatpush1.bf16.msra.mxu0 %v997
          %1147 = vmatprep.subr.bf16.mxu0 0
          %1148 = vmatpush1.bf16.msra.mxu0 %v998
          %1149 = vmatprep.subr.bf16.mxu0 0
          %1150 = vmatpush1.bf16.msra.mxu0 %v999
          %1151 = vmatprep.subr.bf16.mxu0 0
          %1152 = vmatpush1.bf16.msra.mxu0 %v1000
          %1153 = vmatprep.subr.bf16.mxu0 0
          %1154 = vmatpush1.bf16.msra.mxu0 %v1001
          %1155 = vmatprep.subr.bf16.mxu0 0
          %1156 = vmatpush1.bf16.msra.mxu0 %v1002
          %1157 = vmatprep.subr.bf16.mxu0 0
          %1158 = vmatpush1.bf16.msra.mxu0 %v1003
          %1159 = vmatprep.subr.bf16.mxu0 0
          %1160 = vmatpush1.bf16.msra.mxu0 %v1004
          %1161 = vmatprep.subr.bf16.mxu0 0
          %1162 = vmatpush1.bf16.msra.mxu0 %v1005
          %1163 = vmatprep.subr.bf16.mxu0 0
          %1164 = vmatpush1.bf16.msra.mxu0 %v1006
          %1165 = vmatprep.subr.bf16.mxu0 0
          %1166 = vmatpush1.bf16.msra.mxu0 %v1007
          %1167 = vmatprep.subr.bf16.mxu0 0
          %1168 = vmatpush1.bf16.msra.mxu0 %v1008
          %1169 = vmatprep.mubr.bf16.mxu0 %v762
          %1170 = vmatmul.mubr.bf16.gmra.mrb[0].mxu0 %v761
          %v1171 = vpop.f32.mrb[0].mxu0
          %v1172 = vadd.f32 %v1132, %v1171
          %v1173 = vpop.f32.mrb[0].mxu0
          %v1174 = vpop.f32.mrb[0].mxu0
          %v1175 = vpop.f32.mrb[0].mxu0
          %1176 = vdwg.mxu0
          %v1177 = vld [vmem:[#allocation8] sm:$0xff]
          %vm1178 = vcmask 523264
          %1179 = vst.msk [vmem:[#allocation2] sm:$0xff] %vm1178, %v1177
          %v1180 = vld [vmem:[#allocation8 + $0x1] sm:$0xf]
          %v1181 = vadd.f32 %v1180, %v1172
          %vm1182 = vcmask 519168
          %1183 = vst.msk [vmem:[#allocation2 + $0x1] sm:$0xf] %vm1182, %v1181
          %v1184 = vld [vmem:[#allocation2] sm:$0xff]
          %v1185 = vld [vmem:[#allocation9] sm:$0x1]
          %v1186 = vld [vmem:[#allocation9 + $0x1] sm:$0x1]
          %v1187 = vsel %vm1178, %v1184, 0.0
          %1188 = vadd.xlane.f32.xlu0 %v1187
          %v1189 = vpop.xlane.xlu0 %1188
          %v1190 = vrcp.pop 64.0
          %v1191 = vmul.f32 %v1189, %v1190
          %v1192 = vsub.f32 %v1184, %v1191
          %v1193 = vmul.f32 %v1192, %v1192
          %v1194 = vsel %vm1178, %v1193, 0.0
          %1195 = vadd.xlane.f32.xlu0 %v1194
          %v1196 = vpop.xlane.xlu0 %1195
          %v1197 = vmul.f32 %v1196, %v1190
          %v1198 = vadd.f32 %v1197, 1e-05
          %v1199 = vrsqrt.pop %v1198
          %v1200 = vmul.f32 %v1192, %v1199
          %v1201 = vlaneseq
          %v1202 = vshrl.u32 %v1201, 7
          %v1203 = vsub.s32 0, %v1202
          %v1204 = vrot.slane %v1185, %v1203
          %v1205 = vmul.f32 %v1200, %v1204
          %v1206 = vlaneseq
          %v1207 = vshrl.u32 %v1206, 7
          %v1208 = vsub.s32 0, %v1207
          %v1209 = vrot.slane %v1186, %v1208
          %v1210 = vadd.f32 %v1205, %v1209
          %1211 = vst.msk [vmem:[#allocation2] sm:$0xff] %vm1178, %v1210
        $region104: #{clip_backbone_forward.1} parent=59 // pred_fallthru
          _
        %v1212 = vld [vmem:[%s572] sm:$0xff]
        %v1213 = vld [vmem:[%s572 + $0x8] sm:$0xff]
        %v1214 = vld [vmem:[#allocation2] sm:$0xff]
        %vm1215 = vcmask 523264
        %v1216 = vsel %vm1215, %v1214, 0.0
        %1217 = vadd.xlane.f32.xlu0 %v1216
        %v1218 = vpop.xlane.xlu0 %1217
        %v1219 = vrcp.pop 64.0
        %v1220 = vmul.f32 %v1218, %v1219
        %v1221 = vsub.f32 %v1214, %v1220
        %v1222 = vmul.f32 %v1221, %v1221
        %v1223 = vsel %vm1215, %v1222, 0.0
        %1224 = vadd.xlane.f32.xlu0 %v1223
        %v1225 = vpop.xlane.xlu0 %1224
        %v1226 = vmul.f32 %v1225, %v1219
        %v1227 = vadd.f32 %v1226, 1e-05
        %v1228 = vrsqrt.pop %v1227
        %v1229 = vmul.f32 %v1221, %v1228
        %v1230 = vlaneseq
        %v1231 = vshrl.u32 %v1230, 7
        %v1232 = vsub.s32 0, %v1231
        %v1233 = vrot.slane %v1212, %v1232
        %v1234 = vmul.f32 %v1229, %v1233
        %v1235 = vlaneseq
        %v1236 = vshrl.u32 %v1235, 7
        %v1237 = vsub.s32 1, %v1236
        %v1238 = vrot.slane %v1212, %v1237
        %v1239 = vadd.f32 %v1234, %v1238
        %v1240 = vpack.c.bf16 %v1239, %v1239
        %v1241 = vld [vmem:[%s536] sm:$0xff]
        %v1242 = vld [vmem:[%s536 + $0x8] sm:$0xff]
        %v1243 = vld [vmem:[%s536 + $0x10] sm:$0xff]
        %v1244 = vld [vmem:[%s536 + $0x18] sm:$0xff]
        %v1245 = vld [vmem:[%s536 + $0x20] sm:$0xff]
        %v1246 = vld [vmem:[%s536 + $0x28] sm:$0xff]
        %v1247 = vld [vmem:[%s536 + $0x30] sm:$0xff]
        %v1248 = vld [vmem:[%s536 + $0x38] sm:$0xff]
        %v1249 = vlaneseq
        %v1250 = vshrl.u32 %v1249, 7
        %v1251 = vsub.s32 2, %v1250
        %v1252 = vrot.slane %v1212, %v1251
        %v1253 = vlaneseq
        %v1254 = vshrl.u32 %v1253, 7
        %v1255 = vsub.s32 2, %v1254
        %v1256 = vrot.slane %v1213, %v1255
        %v1265 = vunpack.c.l.b16 %v1241
        %v1266 = vunpack.c.h.b16 %v1241
        %v1267 = vunpack.c.l.b16 %v1242
        %v1268 = vunpack.c.h.b16 %v1242
        %v1269 = vunpack.c.l.b16 %v1243
        %v1270 = vunpack.c.h.b16 %v1243
        %v1271 = vunpack.c.l.b16 %v1244
        %v1272 = vunpack.c.h.b16 %v1244
        %v1273 = vunpack.c.l.b16 %v1245
        %v1274 = vunpack.c.h.b16 %v1245
        %v1275 = vunpack.c.l.b16 %v1246
        %v1276 = vunpack.c.h.b16 %v1246
        %v1277 = vunpack.c.l.b16 %v1247
        %v1278 = vunpack.c.h.b16 %v1247
        %v1279 = vunpack.c.l.b16 %v1248
        %v1280 = vunpack.c.h.b16 %v1248
        %v1281 = vpack.c.b16 %v1267, %v1265
        %v1282 = vpack.c.b16 %v1268, %v1266
        %v1283 = vpack.c.b16 %v1271, %v1269
        %v1284 = vpack.c.b16 %v1272, %v1270
        %v1285 = vpack.c.b16 %v1275, %v1273
        %v1286 = vpack.c.b16 %v1276, %v1274
        %v1287 = vpack.c.b16 %v1279, %v1277
        %v1288 = vpack.c.b16 %v1280, %v1278
        %v1298 = vsel %vm1215, %v1240, 0
        %1300 = vmatprep.subr.bf16.mxu0 %v1282
        %1301 = vmatpush1.bf16.msra.mxu0 %v1281
        %1302 = vmatprep.subr.bf16.mxu0 %v1284
        %1303 = vmatpush1.bf16.msra.mxu0 %v1283
        %1304 = vmatprep.subr.bf16.mxu0 %v1286
        %1305 = vmatpush1.bf16.msra.mxu0 %v1285
        %1306 = vmatprep.subr.bf16.mxu0 %v1288
        %1307 = vmatpush1.bf16.msra.mxu0 %v1287
        %1308 = vmatprep.subr.bf16.mxu0 0
        %1309 = vmatpush1.bf16.msra.mxu0 0
        %1310 = vmatprep.subr.bf16.mxu0 0
        %1311 = vmatpush1.bf16.msra.mxu0 0
        %1312 = vmatprep.subr.bf16.mxu0 0
        %1313 = vmatpush1.bf16.msra.mxu0 0
        %1314 = vmatprep.subr.bf16.mxu0 0
        %1315 = vmatpush1.bf16.msra.mxu0 0
        %1316 = vmatprep.subr.bf16.mxu0 0
        %1317 = vmatpush1.bf16.msra.mxu0 0
        %1318 = vmatprep.subr.bf16.mxu0 0
        %1319 = vmatpush1.bf16.msra.mxu0 0
        %1320 = vmatprep.subr.bf16.mxu0 0
        %1321 = vmatpush1.bf16.msra.mxu0 0
        %1322 = vmatprep.subr.bf16.mxu0 0
        %1323 = vmatpush1.bf16.msra.mxu0 0
        %1324 = vmatprep.subr.bf16.mxu0 0
        %1325 = vmatpush1.bf16.msra.mxu0 0
        %1326 = vmatprep.subr.bf16.mxu0 0
        %1327 = vmatpush1.bf16.msra.mxu0 0
        %1328 = vmatprep.subr.bf16.mxu0 0
        %1329 = vmatpush1.bf16.msra.mxu0 0
        %1330 = vmatprep.subr.bf16.mxu0 0
        %1331 = vmatpush1.bf16.msra.mxu0 0
        %1332 = vmatprep.mubr.bf16.mxu0 0
        %1333 = vmatmul.mubr.bf16.gmra.mrb[0].mxu0 %v1298
        %v1334 = vpop.f32.mrb[0].mxu0
        %v1335 = vadd.f32 %v1252, %v1334
        %v1336 = vpop.f32.mrb[0].mxu0
        %v1337 = vadd.f32 %v1256, %v1336
        %v1338 = vpop.f32.mrb[0].mxu0
        %v1339 = vpop.f32.mrb[0].mxu0
        %1340 = vdwg.mxu0
        %1342 = vrot.lane.b32.xlu0 %v1335, 112
        %v1343 = vpop.permute.xlu0 %1342
        %1345 = vrot.lane.b32.xlu0 %v1335, 96
        %v1346 = vpop.permute.xlu0 %1345
        %1348 = vrot.lane.b32.xlu0 %v1335, 80
        %v1349 = vpop.permute.xlu0 %1348
        %v1351 = vpack.c.bf16 %v1335, %v1335
        %v1352 = vpack.c.bf16 %v1343, %v1343
        %v1353 = vpack.c.bf16 %v1346, %v1346
        %v1354 = vpack.c.bf16 %v1349, %v1349
        %1356 = vrot.lane.b32.xlu0 %v1337, 112
        %v1357 = vpop.permute.xlu0 %1356
        %1359 = vrot.lane.b32.xlu0 %v1337, 96
        %v1360 = vpop.permute.xlu0 %1359
        %1362 = vrot.lane.b32.xlu0 %v1337, 80
        %v1363 = vpop.permute.xlu0 %1362
        %v1365 = vpack.c.bf16 %v1337, %v1337
        %v1366 = vpack.c.bf16 %v1357, %v1357
        %v1367 = vpack.c.bf16 %v1360, %v1360
        %v1368 = vpack.c.bf16 %v1363, %v1363
        %1370 = vrot.lane.b32.xlu0 %v1351, 64
        %v1371 = vpop.permute.xlu0 %1370
        %vm1372 = vcmask 130048
        %v1374 = vsel %vm1372, %v1351, 0
        %v1377 = vsel %vm1372, %v1371, 0
        %1379 = vmatprep.subr.bf16.mxu0 0
        %1380 = vmatpush1.bf16.xpose.msra.mxu0 %v1377
        %1381 = vmatprep.subr.bf16.mxu0 0
        %1382 = vmatpush1.bf16.xpose.msra.mxu0 0
        %1383 = vmatprep.subr.bf16.mxu0 0
        %1384 = vmatpush1.bf16.xpose.msra.mxu0 0
        %1385 = vmatprep.subr.bf16.mxu0 0
        %1386 = vmatpush1.bf16.xpose.msra.mxu0 0
        %1387 = vmatprep.subr.bf16.mxu0 0
        %1388 = vmatpush1.bf16.xpose.msra.mxu0 0
        %1389 = vmatprep.subr.bf16.mxu0 0
        %1390 = vmatpush1.bf16.xpose.msra.mxu0 0
        %1391 = vmatprep.subr.bf16.mxu0 0
        %1392 = vmatpush1.bf16.xpose.msra.mxu0 0
        %1393 = vmatprep.subr.bf16.mxu0 0
        %1394 = vmatpush1.bf16.xpose.msra.mxu0 0
        %1395 = vmatprep.subr.bf16.mxu0 0
        %1396 = vmatpush1.bf16.xpose.msra.mxu0 0
        %1397 = vmatprep.subr.bf16.mxu0 0
        %1398 = vmatpush1.bf16.xpose.msra.mxu0 0
        %1399 = vmatprep.subr.bf16.mxu0 0
        %1400 = vmatpush1.bf16.xpose.msra.mxu0 0
        %1401 = vmatprep.subr.bf16.mxu0 0
        %1402 = vmatpush1.bf16.xpose.msra.mxu0 0
        %1403 = vmatprep.subr.bf16.mxu0 0
        %1404 = vmatpush1.bf16.xpose.msra.mxu0 0
        %1405 = vmatprep.subr.bf16.mxu0 0
        %1406 = vmatpush1.bf16.xpose.msra.mxu0 0
        %1407 = vmatprep.subr.bf16.mxu0 0
        %1408 = vmatpush1.bf16.xpose.msra.mxu0 0
        %1409 = vmatprep.subr.bf16.mxu0 0
        %1410 = vmatpush1.bf16.xpose.msra.mxu0 0
        %1411 = vmatprep.mubr.bf16.mxu0 0
        %1412 = vmatmul.mubr.bf16.gmra.mrb[0].mxu0 %v1374
        %v1413 = vpop.f32.mrb[0].mxu0
        %v1414 = vadd.f32 0.0, %v1413
        %v1415 = vpop.f32.mrb[0].mxu0
        %v1416 = vpop.f32.mrb[0].mxu0
        %v1417 = vpop.f32.mrb[0].mxu0
        %1418 = vdwg.mxu0
        %1420 = vrot.lane.b32.xlu0 %v1352, 64
        %v1421 = vpop.permute.xlu0 %1420
        %v1423 = vsel %vm1372, %v1352, 0
        %v1426 = vsel %vm1372, %v1421, 0
        %1428 = vmatprep.subr.bf16.mxu0 0
        %1429 = vmatpush1.bf16.xpose.msra.mxu0 %v1426
        %1430 = vmatprep.subr.bf16.mxu0 0
        %1431 = vmatpush1.bf16.xpose.msra.mxu0 0
        %1432 = vmatprep.subr.bf16.mxu0 0
        %1433 = vmatpush1.bf16.xpose.msra.mxu0 0
        %1434 = vmatprep.subr.bf16.mxu0 0
        %1435 = vmatpush1.bf16.xpose.msra.mxu0 0
        %1436 = vmatprep.subr.bf16.mxu0 0
        %1437 = vmatpush1.bf16.xpose.msra.mxu0 0
        %1438 = vmatprep.subr.bf16.mxu0 0
        %1439 = vmatpush1.bf16.xpose.msra.mxu0 0
        %1440 = vmatprep.subr.bf16.mxu0 0
        %1441 = vmatpush1.bf16.xpose.msra.mxu0 0
        %1442 = vmatprep.subr.bf16.mxu0 0
        %1443 = vmatpush1.bf16.xpose.msra.mxu0 0
        %1444 = vmatprep.subr.bf16.mxu0 0
        %1445 = vmatpush1.bf16.xpose.msra.mxu0 0
        %1446 = vmatprep.subr.bf16.mxu0 0
        %1447 = vmatpush1.bf16.xpose.msra.mxu0 0
        %1448 = vmatprep.subr.bf16.mxu0 0
        %1449 = vmatpush1.bf16.xpose.msra.mxu0 0
        %1450 = vmatprep.subr.bf16.mxu0 0
        %1451 = vmatpush1.bf16.xpose.msra.mxu0 0
        %1452 = vmatprep.subr.bf16.mxu0 0
        %1453 = vmatpush1.bf16.xpose.msra.mxu0 0
        %1454 = vmatprep.subr.bf16.mxu0 0
        %1455 = vmatpush1.bf16.xpose.msra.mxu0 0
        %1456 = vmatprep.subr.bf16.mxu0 0
        %1457 = vmatpush1.bf16.xpose.msra.mxu0 0
        %1458 = vmatprep.subr.bf16.mxu0 0
        %1459 = vmatpush1.bf16.xpose.msra.mxu0 0
        %1460 = vmatprep.mubr.bf16.mxu0 0
        %1461 = vmatmul.mubr.bf16.gmra.mrb[0].mxu0 %v1423
        %v1462 = vpop.f32.mrb[0].mxu0
        %v1463 = vadd.f32 0.0, %v1462
        %v1464 = vpop.f32.mrb[0].mxu0
        %v1465 = vpop.f32.mrb[0].mxu0
        %v1466 = vpop.f32.mrb[0].mxu0
        %1467 = vdwg.mxu0
        %1469 = vrot.lane.b32.xlu0 %v1353, 64
        %v1470 = vpop.permute.xlu0 %1469
        %v1472 = vsel %vm1372, %v1353, 0
        %v1475 = vsel %vm1372, %v1470, 0
        %1477 = vmatprep.subr.bf16.mxu0 0
        %1478 = vmatpush1.bf16.xpose.msra.mxu0 %v1475
        %1479 = vmatprep.subr.bf16.mxu0 0
        %1480 = vmatpush1.bf16.xpose.msra.mxu0 0
        %1481 = vmatprep.subr.bf16.mxu0 0
        %1482 = vmatpush1.bf16.xpose.msra.mxu0 0
        %1483 = vmatprep.subr.bf16.mxu0 0
        %1484 = vmatpush1.bf16.xpose.msra.mxu0 0
        %1485 = vmatprep.subr.bf16.mxu0 0
        %1486 = vmatpush1.bf16.xpose.msra.mxu0 0
        %1487 = vmatprep.subr.bf16.mxu0 0
        %1488 = vmatpush1.bf16.xpose.msra.mxu0 0
        %1489 = vmatprep.subr.bf16.mxu0 0
        %1490 = vmatpush1.bf16.xpose.msra.mxu0 0
        %1491 = vmatprep.subr.bf16.mxu0 0
        %1492 = vmatpush1.bf16.xpose.msra.mxu0 0
        %1493 = vmatprep.subr.bf16.mxu0 0
        %1494 = vmatpush1.bf16.xpose.msra.mxu0 0
        %1495 = vmatprep.subr.bf16.mxu0 0
        %1496 = vmatpush1.bf16.xpose.msra.mxu0 0
        %1497 = vmatprep.subr.bf16.mxu0 0
        %1498 = vmatpush1.bf16.xpose.msra.mxu0 0
        %1499 = vmatprep.subr.bf16.mxu0 0
        %1500 = vmatpush1.bf16.xpose.msra.mxu0 0
        %1501 = vmatprep.subr.bf16.mxu0 0
        %1502 = vmatpush1.bf16.xpose.msra.mxu0 0
        %1503 = vmatprep.subr.bf16.mxu0 0
        %1504 = vmatpush1.bf16.xpose.msra.mxu0 0
        %1505 = vmatprep.subr.bf16.mxu0 0
        %1506 = vmatpush1.bf16.xpose.msra.mxu0 0
        %1507 = vmatprep.subr.bf16.mxu0 0
        %1508 = vmatpush1.bf16.xpose.msra.mxu0 0
        %1509 = vmatprep.mubr.bf16.mxu0 0
        %1510 = vmatmul.mubr.bf16.gmra.mrb[0].mxu0 %v1472
        %v1511 = vpop.f32.mrb[0].mxu0
        %v1512 = vadd.f32 0.0, %v1511
        %v1513 = vpop.f32.mrb[0].mxu0
        %v1514 = vpop.f32.mrb[0].mxu0
        %v1515 = vpop.f32.mrb[0].mxu0
        %1516 = vdwg.mxu0
        %1518 = vrot.lane.b32.xlu0 %v1354, 64
        %v1519 = vpop.permute.xlu0 %1518
        %v1521 = vsel %vm1372, %v1354, 0
        %v1524 = vsel %vm1372, %v1519, 0
        %1526 = vmatprep.subr.bf16.mxu0 0
        %1527 = vmatpush1.bf16.xpose.msra.mxu0 %v1524
        %1528 = vmatprep.subr.bf16.mxu0 0
        %1529 = vmatpush1.bf16.xpose.msra.mxu0 0
        %1530 = vmatprep.subr.bf16.mxu0 0
        %1531 = vmatpush1.bf16.xpose.msra.mxu0 0
        %1532 = vmatprep.subr.bf16.mxu0 0
        %1533 = vmatpush1.bf16.xpose.msra.mxu0 0
        %1534 = vmatprep.subr.bf16.mxu0 0
        %1535 = vmatpush1.bf16.xpose.msra.mxu0 0
        %1536 = vmatprep.subr.bf16.mxu0 0
        %1537 = vmatpush1.bf16.xpose.msra.mxu0 0
        %1538 = vmatprep.subr.bf16.mxu0 0
        %1539 = vmatpush1.bf16.xpose.msra.mxu0 0
        %1540 = vmatprep.subr.bf16.mxu0 0
        %1541 = vmatpush1.bf16.xpose.msra.mxu0 0
        %1542 = vmatprep.subr.bf16.mxu0 0
        %1543 = vmatpush1.bf16.xpose.msra.mxu0 0
        %1544 = vmatprep.subr.bf16.mxu0 0
        %1545 = vmatpush1.bf16.xpose.msra.mxu0 0
        %1546 = vmatprep.subr.bf16.mxu0 0
        %1547 = vmatpush1.bf16.xpose.msra.mxu0 0
        %1548 = vmatprep.subr.bf16.mxu0 0
        %1549 = vmatpush1.bf16.xpose.msra.mxu0 0
        %1550 = vmatprep.subr.bf16.mxu0 0
        %1551 = vmatpush1.bf16.xpose.msra.mxu0 0
        %1552 = vmatprep.subr.bf16.mxu0 0
        %1553 = vmatpush1.bf16.xpose.msra.mxu0 0
        %1554 = vmatprep.subr.bf16.mxu0 0
        %1555 = vmatpush1.bf16.xpose.msra.mxu0 0
        %1556 = vmatprep.subr.bf16.mxu0 0
        %1557 = vmatpush1.bf16.xpose.msra.mxu0 0
        %1558 = vmatprep.mubr.bf16.mxu0 0
        %1559 = vmatmul.mubr.bf16.gmra.mrb[0].mxu0 %v1521
        %v1560 = vpop.f32.mrb[0].mxu0
        %v1561 = vadd.f32 0.0, %v1560
        %v1562 = vpop.f32.mrb[0].mxu0
        %v1563 = vpop.f32.mrb[0].mxu0
        %v1564 = vpop.f32.mrb[0].mxu0
        %1565 = vdwg.mxu0
        %v1566 = vmul.f32 %v1414, 0.25
        %v1567 = vmul.f32 %v1463, 0.25
        %v1568 = vmul.f32 %v1512, 0.25
        %v1569 = vmul.f32 %v1561, 0.25
        %v1570 = vlaneseq
        %v1571 = vand.u32 %v1570, 127
        %vm1572 = vcmp.lt.s32.totalorder %v1571, 5
        %v1573 = vsel %vm1572, %v1566, -1e+30
        %v1574 = vsel %vm1572, %v1567, -1e+30
        %v1575 = vsel %vm1572, %v1568, -1e+30
        %v1576 = vsel %vm1572, %v1569, -1e+30
        %vm1577 = vcmask 64512
        %v1578 = vsel %vm1577, %v1573, -inf
        %1579 = vmax.xlane.f32.xlu0 %v1578
        %v1580 = vpop.xlane.xlu0 %1579
        %v1581 = vsel %vm1577, %v1574, -inf
        %1582 = vmax.xlane.f32.xlu0 %v1581
        %v1583 = vpop.xlane.xlu0 %1582
        %v1584 = vsel %vm1577, %v1575, -inf
        %1585 = vmax.xlane.f32.xlu0 %v1584
        %v1586 = vpop.xlane.xlu0 %1585
        %v1587 = vsel %vm1577, %v1576, -inf
        %1588 = vmax.xlane.f32.xlu0 %v1587
        %v1589 = vpop.xlane.xlu0 %1588
        %v1590 = vsub.f32 %v1573, %v1580
        %v1591 = vsub.f32 %v1574, %v1583
        %v1592 = vsub.f32 %v1575, %v1586
        %v1593 = vsub.f32 %v1576, %v1589
        %v1594 = vmul.f32 %v1590, 1.442695
        %v1595 = vpow.pop %v1594
        %v1596 = vmul.f32 %v1591, 1.442695
        %v1597 = vpow.pop %v1596
        %v1598 = vmul.f32 %v1592, 1.442695
        %v1599 = vpow.pop %v1598
        %v1600 = vmul.f32 %v1593, 1.442695
        %v1601 = vpow.pop %v1600
        %v1602 = vsel %vm1577, %v1595, 0.0
        %1603 = vadd.xlane.f32.xlu0 %v1602
        %v1604 = vpop.xlane.xlu0 %1603
        %v1605 = vsel %vm1577, %v1597, 0.0
        %1606 = vadd.xlane.f32.xlu0 %v1605
        %v1607 = vpop.xlane.xlu0 %1606
        %v1608 = vsel %vm1577, %v1599, 0.0
        %1609 = vadd.xlane.f32.xlu0 %v1608
        %v1610 = vpop.xlane.xlu0 %1609
        %v1611 = vsel %vm1577, %v1601, 0.0
        %1612 = vadd.xlane.f32.xlu0 %v1611
        %v1613 = vpop.xlane.xlu0 %1612
        %v1614 = vrcp.pop %v1604
        %v1615 = vrcp.pop %v1607
        %v1616 = vrcp.pop %v1610
        %v1617 = vrcp.pop %v1613
        %v1618 = vmul.f32 %v1595, %v1614
        %v1619 = vmul.f32 %v1597, %v1615
        %v1620 = vmul.f32 %v1599, %v1616
        %v1621 = vmul.f32 %v1601, %v1617
        %v1622 = vpack.c.bf16 %v1618, %v1618
        %v1623 = vpack.c.bf16 %v1619, %v1619
        %v1624 = vpack.c.bf16 %v1620, %v1620
        %v1625 = vpack.c.bf16 %v1621, %v1621
        %v1627 = vsel %vm1577, %v1622, 0
        %vm1629 = vcmask 1043456
        %v1631 = vsel %vm1629, %v1365, 0
        %1633 = vmatprep.subr.bf16.mxu0 0
        %1634 = vmatpush1.bf16.msra.mxu0 %v1631
        %1635 = vmatprep.subr.bf16.mxu0 0
        %1636 = vmatpush1.bf16.msra.mxu0 0
        %1637 = vmatprep.subr.bf16.mxu0 0
        %1638 = vmatpush1.bf16.msra.mxu0 0
        %1639 = vmatprep.subr.bf16.mxu0 0
        %1640 = vmatpush1.bf16.msra.mxu0 0
        %1641 = vmatprep.subr.bf16.mxu0 0
        %1642 = vmatpush1.bf16.msra.mxu0 0
        %1643 = vmatprep.subr.bf16.mxu0 0
        %1644 = vmatpush1.bf16.msra.mxu0 0
        %1645 = vmatprep.subr.bf16.mxu0 0
        %1646 = vmatpush1.bf16.msra.mxu0 0
        %1647 = vmatprep.subr.bf16.mxu0 0
        %1648 = vmatpush1.bf16.msra.mxu0 0
        %1649 = vmatprep.subr.bf16.mxu0 0
        %1650 = vmatpush1.bf16.msra.mxu0 0
        %1651 = vmatprep.subr.bf16.mxu0 0
        %1652 = vmatpush1.bf16.msra.mxu0 0
        %1653 = vmatprep.subr.bf16.mxu0 0
        %1654 = vmatpush1.bf16.msra.mxu0 0
        %1655 = vmatprep.subr.bf16.mxu0 0
        %1656 = vmatpush1.bf16.msra.mxu0 0
        %1657 = vmatprep.subr.bf16.mxu0 0
        %1658 = vmatpush1.bf16.msra.mxu0 0
        %1659 = vmatprep.subr.bf16.mxu0 0
        %1660 = vmatpush1.bf16.msra.mxu0 0
        %1661 = vmatprep.subr.bf16.mxu0 0
        %1662 = vmatpush1.bf16.msra.mxu0 0
        %1663 = vmatprep.subr.bf16.mxu0 0
        %1664 = vmatpush1.bf16.msra.mxu0 0
        %1665 = vmatprep.mubr.bf16.mxu0 0
        %1666 = vmatmul.mubr.bf16.gmra.mrb[0].mxu0 %v1627
        %v1667 = vpop.f32.mrb[0].mxu0
        %v1668 = vadd.f32 0.0, %v1667
        %v1669 = vpop.f32.mrb[0].mxu0
        %v1670 = vpop.f32.mrb[0].mxu0
        %v1671 = vpop.f32.mrb[0].mxu0
        %1672 = vdwg.mxu0
        %v1674 = vsel %vm1577, %v1623, 0
        %v1677 = vsel %vm1629, %v1366, 0
        %1679 = vmatprep.subr.bf16.mxu0 0
        %1680 = vmatpush1.bf16.msra.mxu0 %v1677
        %1681 = vmatprep.subr.bf16.mxu0 0
        %1682 = vmatpush1.bf16.msra.mxu0 0
        %1683 = vmatprep.subr.bf16.mxu0 0
        %1684 = vmatpush1.bf16.msra.mxu0 0
        %1685 = vmatprep.subr.bf16.mxu0 0
        %1686 = vmatpush1.bf16.msra.mxu0 0
        %1687 = vmatprep.subr.bf16.mxu0 0
        %1688 = vmatpush1.bf16.msra.mxu0 0
        %1689 = vmatprep.subr.bf16.mxu0 0
        %1690 = vmatpush1.bf16.msra.mxu0 0
        %1691 = vmatprep.subr.bf16.mxu0 0
        %1692 = vmatpush1.bf16.msra.mxu0 0
        %1693 = vmatprep.subr.bf16.mxu0 0
        %1694 = vmatpush1.bf16.msra.mxu0 0
        %1695 = vmatprep.subr.bf16.mxu0 0
        %1696 = vmatpush1.bf16.msra.mxu0 0
        %1697 = vmatprep.subr.bf16.mxu0 0
        %1698 = vmatpush1.bf16.msra.mxu0 0
        %1699 = vmatprep.subr.bf16.mxu0 0
        %1700 = vmatpush1.bf16.msra.mxu0 0
        %1701 = vmatprep.subr.bf16.mxu0 0
        %1702 = vmatpush1.bf16.msra.mxu0 0
        %1703 = vmatprep.subr.bf16.mxu0 0
        %1704 = vmatpush1.bf16.msra.mxu0 0
        %1705 = vmatprep.subr.bf16.mxu0 0
        %1706 = vmatpush1.bf16.msra.mxu0 0
        %1707 = vmatprep.subr.bf16.mxu0 0
        %1708 = vmatpush1.bf16.msra.mxu0 0
        %1709 = vmatprep.subr.bf16.mxu0 0
        %1710 = vmatpush1.bf16.msra.mxu0 0
        %1711 = vmatprep.mubr.bf16.mxu0 0
        %1712 = vmatmul.mubr.bf16.gmra.mrb[0].mxu0 %v1674
        %v1713 = vpop.f32.mrb[0].mxu0
        %v1714 = vadd.f32 0.0, %v1713
        %v1715 = vpop.f32.mrb[0].mxu0
        %v1716 = vpop.f32.mrb[0].mxu0
        %v1717 = vpop.f32.mrb[0].mxu0
        %1718 = vdwg.mxu0
        %v1720 = vsel %vm1577, %v1624, 0
        %v1723 = vsel %vm1629, %v1367, 0
        %1725 = vmatprep.subr.bf16.mxu0 0
        %1726 = vmatpush1.bf16.msra.mxu0 %v1723
        %1727 = vmatprep.subr.bf16.mxu0 0
        %1728 = vmatpush1.bf16.msra.mxu0 0
        %1729 = vmatprep.subr.bf16.mxu0 0
        %1730 = vmatpush1.bf16.msra.mxu0 0
        %1731 = vmatprep.subr.bf16.mxu0 0
        %1732 = vmatpush1.bf16.msra.mxu0 0
        %1733 = vmatprep.subr.bf16.mxu0 0
        %1734 = vmatpush1.bf16.msra.mxu0 0
        %1735 = vmatprep.subr.bf16.mxu0 0
        %1736 = vmatpush1.bf16.msra.mxu0 0
        %1737 = vmatprep.subr.bf16.mxu0 0
        %1738 = vmatpush1.bf16.msra.mxu0 0
        %1739 = vmatprep.subr.bf16.mxu0 0
        %1740 = vmatpush1.bf16.msra.mxu0 0
        %1741 = vmatprep.subr.bf16.mxu0 0
        %1742 = vmatpush1.bf16.msra.mxu0 0
        %1743 = vmatprep.subr.bf16.mxu0 0
        %1744 = vmatpush1.bf16.msra.mxu0 0
        %1745 = vmatprep.subr.bf16.mxu0 0
        %1746 = vmatpush1.bf16.msra.mxu0 0
        %1747 = vmatprep.subr.bf16.mxu0 0
        %1748 = vmatpush1.bf16.msra.mxu0 0
        %1749 = vmatprep.subr.bf16.mxu0 0
        %1750 = vmatpush1.bf16.msra.mxu0 0
        %1751 = vmatprep.subr.bf16.mxu0 0
        %1752 = vmatpush1.bf16.msra.mxu0 0
        %1753 = vmatprep.subr.bf16.mxu0 0
        %1754 = vmatpush1.bf16.msra.mxu0 0
        %1755 = vmatprep.subr.bf16.mxu0 0
        %1756 = vmatpush1.bf16.msra.mxu0 0
        %1757 = vmatprep.mubr.bf16.mxu0 0
        %1758 = vmatmul.mubr.bf16.gmra.mrb[0].mxu0 %v1720
        %v1759 = vpop.f32.mrb[0].mxu0
        %v1760 = vadd.f32 0.0, %v1759
        %v1761 = vpop.f32.mrb[0].mxu0
        %v1762 = vpop.f32.mrb[0].mxu0
        %v1763 = vpop.f32.mrb[0].mxu0
        %1764 = vdwg.mxu0
        %v1766 = vsel %vm1577, %v1625, 0
        %v1769 = vsel %vm1629, %v1368, 0
        %1771 = vmatprep.subr.bf16.mxu0 0
        %1772 = vmatpush1.bf16.msra.mxu0 %v1769
        %1773 = vmatprep.subr.bf16.mxu0 0
        %1774 = vmatpush1.bf16.msra.mxu0 0
        %1775 = vmatprep.subr.bf16.mxu0 0
        %1776 = vmatpush1.bf16.msra.mxu0 0
        %1777 = vmatprep.subr.bf16.mxu0 0
        %1778 = vmatpush1.bf16.msra.mxu0 0
        %1779 = vmatprep.subr.bf16.mxu0 0
        %1780 = vmatpush1.bf16.msra.mxu0 0
        %1781 = vmatprep.subr.bf16.mxu0 0
        %1782 = vmatpush1.bf16.msra.mxu0 0
        %1783 = vmatprep.subr.bf16.mxu0 0
        %1784 = vmatpush1.bf16.msra.mxu0 0
        %1785 = vmatprep.subr.bf16.mxu0 0
        %1786 = vmatpush1.bf16.msra.mxu0 0
        %1787 = vmatprep.subr.bf16.mxu0 0
        %1788 = vmatpush1.bf16.msra.mxu0 0
        %1789 = vmatprep.subr.bf16.mxu0 0
        %1790 = vmatpush1.bf16.msra.mxu0 0
        %1791 = vmatprep.subr.bf16.mxu0 0
        %1792 = vmatpush1.bf16.msra.mxu0 0
        %1793 = vmatprep.subr.bf16.mxu0 0
        %1794 = vmatpush1.bf16.msra.mxu0 0
        %1795 = vmatprep.subr.bf16.mxu0 0
        %1796 = vmatpush1.bf16.msra.mxu0 0
        %1797 = vmatprep.subr.bf16.mxu0 0
        %1798 = vmatpush1.bf16.msra.mxu0 0
        %1799 = vmatprep.subr.bf16.mxu0 0
        %1800 = vmatpush1.bf16.msra.mxu0 0
        %1801 = vmatprep.subr.bf16.mxu0 0
        %1802 = vmatpush1.bf16.msra.mxu0 0
        %1803 = vmatprep.mubr.bf16.mxu0 0
        %1804 = vmatmul.mubr.bf16.gmra.mrb[0].mxu0 %v1766
        %v1805 = vpop.f32.mrb[0].mxu0
        %v1806 = vadd.f32 0.0, %v1805
        %v1807 = vpop.f32.mrb[0].mxu0
        %v1808 = vpop.f32.mrb[0].mxu0
        %v1809 = vpop.f32.mrb[0].mxu0
        %1810 = vdwg.mxu0
        %1812 = vrot.lane.b32.xlu0 %v1714, 16
        %v1813 = vpop.permute.xlu0 %1812
        %1816 = vrot.lane.b32.xlu0 %v1760, 32
        %v1817 = vpop.permute.xlu0 %1816
        %1820 = vrot.lane.b32.xlu0 %v1806, 48
        %v1821 = vpop.permute.xlu0 %1820
        %v1823 = vsel %vm1372, %v1668, %v1813
        %vm1824 = vcmask 261120
        %v1825 = vsel %vm1824, %v1823, %v1817
        %vm1826 = vcmask 392192
        %v1827 = vsel %vm1826, %v1825, %v1821
        %v1828 = vpack.c.bf16 %v1827, %v1827
        %v1829 = vld [vmem:[%s545] sm:$0xf]
        %v1830 = vld [vmem:[%s545 + $0x4] sm:$0xf]
        %v1831 = vld [vmem:[%s545 + $0x8] sm:$0xf]
        %v1832 = vld [vmem:[%s545 + $0xc] sm:$0xf]
        %v1833 = vld [vmem:[%s545 + $0x10] sm:$0xf]
        %v1834 = vld [vmem:[%s545 + $0x14] sm:$0xf]
        %v1835 = vld [vmem:[%s545 + $0x18] sm:$0xf]
        %v1836 = vld [vmem:[%s545 + $0x1c] sm:$0xf]
        %v1845 = vunpack.c.l.b16 %v1829
        %v1846 = vunpack.c.l.b16 %v1830
        %v1847 = vunpack.c.l.b16 %v1831
        %v1848 = vunpack.c.l.b16 %v1832
        %v1849 = vunpack.c.l.b16 %v1833
        %v1850 = vunpack.c.l.b16 %v1834
        %v1851 = vunpack.c.l.b16 %v1835
        %v1852 = vunpack.c.l.b16 %v1836
        %v1853 = vpack.c.b16 %v1846, %v1845
        %v1854 = vpack.c.b16 %v1848, %v1847
        %v1855 = vpack.c.b16 %v1850, %v1849
        %v1856 = vpack.c.b16 %v1852, %v1851
        %v1862 = vsel %vm1215, %v1828, 0
        %1864 = vmatprep.subr.bf16.mxu0 0
        %1865 = vmatpush1.bf16.msra.mxu0 %v1853
        %1866 = vmatprep.subr.bf16.mxu0 0
        %1867 = vmatpush1.bf16.msra.mxu0 %v1854
        %1868 = vmatprep.subr.bf16.mxu0 0
        %1869 = vmatpush1.bf16.msra.mxu0 %v1855
        %1870 = vmatprep.subr.bf16.mxu0 0
        %1871 = vmatpush1.bf16.msra.mxu0 %v1856
        %1872 = vmatprep.subr.bf16.mxu0 0
        %1873 = vmatpush1.bf16.msra.mxu0 0
        %1874 = vmatprep.subr.bf16.mxu0 0
        %1875 = vmatpush1.bf16.msra.mxu0 0
        %1876 = vmatprep.subr.bf16.mxu0 0
        %1877 = vmatpush1.bf16.msra.mxu0 0
        %1878 = vmatprep.subr.bf16.mxu0 0
        %1879 = vmatpush1.bf16.msra.mxu0 0
        %1880 = vmatprep.subr.bf16.mxu0 0
        %1881 = vmatpush1.bf16.msra.mxu0 0
        %1882 = vmatprep.subr.bf16.mxu0 0
        %1883 = vmatpush1.bf16.msra.mxu0 0
        %1884 = vmatprep.subr.bf16.mxu0 0
        %1885 = vmatpush1.bf16.msra.mxu0 0
        %1886 = vmatprep.subr.bf16.mxu0 0
        %1887 = vmatpush1.bf16.msra.mxu0 0
        %1888 = vmatprep.subr.bf16.mxu0 0
        %1889 = vmatpush1.bf16.msra.mxu0 0
        %1890 = vmatprep.subr.bf16.mxu0 0
        %1891 = vmatpush1.bf16.msra.mxu0 0
        %1892 = vmatprep.subr.bf16.mxu0 0
        %1893 = vmatpush1.bf16.msra.mxu0 0
        %1894 = vmatprep.subr.bf16.mxu0 0
        %1895 = vmatpush1.bf16.msra.mxu0 0
        %1896 = vmatprep.mubr.bf16.mxu0 0
        %1897 = vmatmul.mubr.bf16.gmra.mrb[0].mxu0 %v1862
        %v1898 = vpop.f32.mrb[0].mxu0
        %v1899 = vadd.f32 0.0, %v1898
        %v1900 = vpop.f32.mrb[0].mxu0
        %v1901 = vpop.f32.mrb[0].mxu0
        %v1902 = vpop.f32.mrb[0].mxu0
        %1903 = vdwg.mxu0
        %v1904 = vadd.f32 %v1214, %v1899
        %v1905 = vlaneseq
        %v1906 = vshrl.u32 %v1905, 7
        %v1907 = vsub.s32 3, %v1906
        %v1908 = vrot.slane %v1212, %v1907
        %v1909 = vadd.f32 %v1904, %v1908
        %v1910 = vsel %vm1215, %v1909, 0.0
        %1911 = vadd.xlane.f32.xlu0 %v1910
        %v1912 = vpop.xlane.xlu0 %1911
        %v1913 = vmul.f32 %v1912, %v1219
        %v1914 = vsub.f32 %v1909, %v1913
        %v1915 = vmul.f32 %v1914, %v1914
        %v1916 = vsel %vm1215, %v1915, 0.0
        %1917 = vadd.xlane.f32.xlu0 %v1916
        %v1918 = vpop.xlane.xlu0 %1917
        %v1919 = vmul.f32 %v1918, %v1219
        %v1920 = vadd.f32 %v1919, 1e-05
        %v1921 = vrsqrt.pop %v1920
        %v1922 = vmul.f32 %v1914, %v1921
        %v1923 = vlaneseq
        %v1924 = vshrl.u32 %v1923, 7
        %v1925 = vsub.s32 4, %v1924
        %v1926 = vrot.slane %v1212, %v1925
        %v1927 = vmul.f32 %v1922, %v1926
        %v1928 = vlaneseq
        %v1929 = vshrl.u32 %v1928, 7
        %v1930 = vsub.s32 5, %v1929
        %v1931 = vrot.slane %v1212, %v1930
        %v1932 = vadd.f32 %v1927, %v1931
        %v1933 = vpack.c.bf16 %v1932, %v1932
        %v1934 = vld [vmem:[%s554] sm:$0xff]
        %v1935 = vld [vmem:[%s554 + $0x8] sm:$0xff]
        %v1936 = vld [vmem:[%s554 + $0x10] sm:$0xff]
        %v1937 = vld [vmem:[%s554 + $0x18] sm:$0xff]
        %v1938 = vld [vmem:[%s554 + $0x20] sm:$0xff]
        %v1939 = vld [vmem:[%s554 + $0x28] sm:$0xff]
        %v1940 = vld [vmem:[%s554 + $0x30] sm:$0xff]
        %v1941 = vld [vmem:[%s554 + $0x38] sm:$0xff]
        %v1942 = vlaneseq
        %v1943 = vshrl.u32 %v1942, 7
        %v1944 = vsub.s32 6, %v1943
        %v1945 = vrot.slane %v1212, %v1944
        %v1946 = vlaneseq
        %v1947 = vshrl.u32 %v1946, 7
        %v1948 = vsub.s32 6, %v1947
        %v1949 = vrot.slane %v1213, %v1948
        %v1958 = vunpack.c.l.b16 %v1934
        %v1959 = vunpack.c.h.b16 %v1934
        %v1960 = vunpack.c.l.b16 %v1935
        %v1961 = vunpack.c.h.b16 %v1935
        %v1962 = vunpack.c.l.b16 %v1936
        %v1963 = vunpack.c.h.b16 %v1936
        %v1964 = vunpack.c.l.b16 %v1937
        %v1965 = vunpack.c.h.b16 %v1937
        %v1966 = vunpack.c.l.b16 %v1938
        %v1967 = vunpack.c.h.b16 %v1938
        %v1968 = vunpack.c.l.b16 %v1939
        %v1969 = vunpack.c.h.b16 %v1939
        %v1970 = vunpack.c.l.b16 %v1940
        %v1971 = vunpack.c.h.b16 %v1940
        %v1972 = vunpack.c.l.b16 %v1941
        %v1973 = vunpack.c.h.b16 %v1941
        %v1974 = vpack.c.b16 %v1960, %v1958
        %v1975 = vpack.c.b16 %v1961, %v1959
        %v1976 = vpack.c.b16 %v1964, %v1962
        %v1977 = vpack.c.b16 %v1965, %v1963
        %v1978 = vpack.c.b16 %v1968, %v1966
        %v1979 = vpack.c.b16 %v1969, %v1967
        %v1980 = vpack.c.b16 %v1972, %v1970
        %v1981 = vpack.c.b16 %v1973, %v1971
        %v1991 = vsel %vm1215, %v1933, 0
        %1993 = vmatprep.subr.bf16.mxu0 %v1975
        %1994 = vmatpush1.bf16.msra.mxu0 %v1974
        %1995 = vmatprep.subr.bf16.mxu0 %v1977
        %1996 = vmatpush1.bf16.msra.mxu0 %v1976
        %1997 = vmatprep.subr.bf16.mxu0 %v1979
        %1998 = vmatpush1.bf16.msra.mxu0 %v1978
        %1999 = vmatprep.subr.bf16.mxu0 %v1981
        %2000 = vmatpush1.bf16.msra.mxu0 %v1980
        %2001 = vmatprep.subr.bf16.mxu0 0
        %2002 = vmatpush1.bf16.msra.mxu0 0
        %2003 = vmatprep.subr.bf16.mxu0 0
        %2004 = vmatpush1.bf16.msra.mxu0 0
        %2005 = vmatprep.subr.bf16.mxu0 0
        %2006 = vmatpush1.bf16.msra.mxu0 0
        %2007 = vmatprep.subr.bf16.mxu0 0
        %2008 = vmatpush1.bf16.msra.mxu0 0
        %2009 = vmatprep.subr.bf16.mxu0 0
        %2010 = vmatpush1.bf16.msra.mxu0 0
        %2011 = vmatprep.subr.bf16.mxu0 0
        %2012 = vmatpush1.bf16.msra.mxu0 0
        %2013 = vmatprep.subr.bf16.mxu0 0
        %2014 = vmatpush1.bf16.msra.mxu0 0
        %2015 = vmatprep.subr.bf16.mxu0 0
        %2016 = vmatpush1.bf16.msra.mxu0 0
        %2017 = vmatprep.subr.bf16.mxu0 0
        %2018 = vmatpush1.bf16.msra.mxu0 0
        %2019 = vmatprep.subr.bf16.mxu0 0
        %2020 = vmatpush1.bf16.msra.mxu0 0
        %2021 = vmatprep.subr.bf16.mxu0 0
        %2022 = vmatpush1.bf16.msra.mxu0 0
        %2023 = vmatprep.subr.bf16.mxu0 0
        %2024 = vmatpush1.bf16.msra.mxu0 0
        %2025 = vmatprep.mubr.bf16.mxu0 0
        %2026 = vmatmul.mubr.bf16.gmra.mrb[0].mxu0 %v1991
        %v2027 = vpop.f32.mrb[0].mxu0
        %v2028 = vadd.f32 %v1945, %v2027
        %v2029 = vpop.f32.mrb[0].mxu0
        %v2030 = vadd.f32 %v1949, %v2029
        %v2031 = vpop.f32.mrb[0].mxu0
        %v2032 = vpop.f32.mrb[0].mxu0
        %2033 = vdwg.mxu0
        %v2034 = vmul.f32 %v2028, 1.702
        %v2035 = vmul.f32 %v2030, 1.702
        %v2036 = vxor.u32 %v2034, 2147483648
        %v2037 = vxor.u32 %v2035, 2147483648
        %v2038 = vmul.f32 %v2036, 1.442695
        %v2039 = vpow.pop %v2038
        %v2040 = vmul.f32 %v2037, 1.442695
        %v2041 = vpow.pop %v2040
        %v2042 = vadd.f32 %v2039, 1.0
        %v2043 = vadd.f32 %v2041, 1.0
        %v2044 = vrcp.pop %v2042
        %v2045 = vmul.f32 1.0, %v2044
        %v2046 = vrcp.pop %v2043
        %v2047 = vmul.f32 1.0, %v2046
        %v2048 = vmul.f32 %v2028, %v2045
        %v2049 = vmul.f32 %v2030, %v2047
        %v2050 = vpack.c.bf16 %v2048, %v2048
        %v2051 = vpack.c.bf16 %v2049, %v2049
        %v2052 = vld [vmem:[%s563] sm:$0xf]
        %v2053 = vld [vmem:[%s563 + $0x4] sm:$0xf]
        %v2054 = vld [vmem:[%s563 + $0x8] sm:$0xf]
        %v2055 = vld [vmem:[%s563 + $0xc] sm:$0xf]
        %v2056 = vld [vmem:[%s563 + $0x10] sm:$0xf]
        %v2057 = vld [vmem:[%s563 + $0x14] sm:$0xf]
        %v2058 = vld [vmem:[%s563 + $0x18] sm:$0xf]
        %v2059 = vld [vmem:[%s563 + $0x1c] sm:$0xf]
        %v2060 = vld [vmem:[%s563 + $0x20] sm:$0xf]
        %v2061 = vld [vmem:[%s563 + $0x24] sm:$0xf]
        %v2062 = vld [vmem:[%s563 + $0x28] sm:$0xf]
        %v2063 = vld [vmem:[%s563 + $0x2c] sm:$0xf]
        %v2064 = vld [vmem:[%s563 + $0x30] sm:$0xf]
        %v2065 = vld [vmem:[%s563 + $0x34] sm:$0xf]
        %v2066 = vld [vmem:[%s563 + $0x38] sm:$0xf]
        %v2067 = vld [vmem:[%s563 + $0x3c] sm:$0xf]
        %v2068 = vld [vmem:[%s563 + $0x40] sm:$0xf]
        %v2069 = vld [vmem:[%s563 + $0x44] sm:$0xf]
        %v2070 = vld [vmem:[%s563 + $0x48] sm:$0xf]
        %v2071 = vld [vmem:[%s563 + $0x4c] sm:$0xf]
        %v2072 = vld [vmem:[%s563 + $0x50] sm:$0xf]
        %v2073 = vld [vmem:[%s563 + $0x54] sm:$0xf]
        %v2074 = vld [vmem:[%s563 + $0x58] sm:$0xf]
        %v2075 = vld [vmem:[%s563 + $0x5c] sm:$0xf]
        %v2076 = vld [vmem:[%s563 + $0x60] sm:$0xf]
        %v2077 = vld [vmem:[%s563 + $0x64] sm:$0xf]
        %v2078 = vld [vmem:[%s563 + $0x68] sm:$0xf]
        %v2079 = vld [vmem:[%s563 + $0x6c] sm:$0xf]
        %v2080 = vld [vmem:[%s563 + $0x70] sm:$0xf]
        %v2081 = vld [vmem:[%s563 + $0x74] sm:$0xf]
        %v2082 = vld [vmem:[%s563 + $0x78] sm:$0xf]
        %v2083 = vld [vmem:[%s563 + $0x7c] sm:$0xf]
        %v2084 = vlaneseq
        %v2085 = vshrl.u32 %v2084, 7
        %v2086 = vsub.s32 7, %v2085
        %v2087 = vrot.slane %v1212, %v2086
        %v2120 = vunpack.c.l.b16 %v2052
        %v2121 = vunpack.c.l.b16 %v2053
        %v2122 = vunpack.c.l.b16 %v2054
        %v2123 = vunpack.c.l.b16 %v2055
        %v2124 = vunpack.c.l.b16 %v2056
        %v2125 = vunpack.c.l.b16 %v2057
        %v2126 = vunpack.c.l.b16 %v2058
        %v2127 = vunpack.c.l.b16 %v2059
        %v2128 = vunpack.c.l.b16 %v2060
        %v2129 = vunpack.c.l.b16 %v2061
        %v2130 = vunpack.c.l.b16 %v2062
        %v2131 = vunpack.c.l.b16 %v2063
        %v2132 = vunpack.c.l.b16 %v2064
        %v2133 = vunpack.c.l.b16 %v2065
        %v2134 = vunpack.c.l.b16 %v2066
        %v2135 = vunpack.c.l.b16 %v2067
        %v2136 = vunpack.c.l.b16 %v2068
        %v2137 = vunpack.c.l.b16 %v2069
        %v2138 = vunpack.c.l.b16 %v2070
        %v2139 = vunpack.c.l.b16 %v2071
        %v2140 = vunpack.c.l.b16 %v2072
        %v2141 = vunpack.c.l.b16 %v2073
        %v2142 = vunpack.c.l.b16 %v2074
        %v2143 = vunpack.c.l.b16 %v2075
        %v2144 = vunpack.c.l.b16 %v2076
        %v2145 = vunpack.c.l.b16 %v2077
        %v2146 = vunpack.c.l.b16 %v2078
        %v2147 = vunpack.c.l.b16 %v2079
        %v2148 = vunpack.c.l.b16 %v2080
        %v2149 = vunpack.c.l.b16 %v2081
        %v2150 = vunpack.c.l.b16 %v2082
        %v2151 = vunpack.c.l.b16 %v2083
        %v2152 = vpack.c.b16 %v2121, %v2120
        %v2153 = vpack.c.b16 %v2123, %v2122
        %v2154 = vpack.c.b16 %v2125, %v2124
        %v2155 = vpack.c.b16 %v2127, %v2126
        %v2156 = vpack.c.b16 %v2129, %v2128
        %v2157 = vpack.c.b16 %v2131, %v2130
        %v2158 = vpack.c.b16 %v2133, %v2132
        %v2159 = vpack.c.b16 %v2135, %v2134
        %v2160 = vpack.c.b16 %v2137, %v2136
        %v2161 = vpack.c.b16 %v2139, %v2138
        %v2162 = vpack.c.b16 %v2141, %v2140
        %v2163 = vpack.c.b16 %v2143, %v2142
        %v2164 = vpack.c.b16 %v2145, %v2144
        %v2165 = vpack.c.b16 %v2147, %v2146
        %v2166 = vpack.c.b16 %v2149, %v2148
        %v2167 = vpack.c.b16 %v2151, %v2150
        %2184 = vmatprep.subr.bf16.mxu0 0
        %2185 = vmatpush1.bf16.msra.mxu0 %v2152
        %2186 = vmatprep.subr.bf16.mxu0 0
        %2187 = vmatpush1.bf16.msra.mxu0 %v2153
        %2188 = vmatprep.subr.bf16.mxu0 0
        %2189 = vmatpush1.bf16.msra.mxu0 %v2154
        %2190 = vmatprep.subr.bf16.mxu0 0
        %2191 = vmatpush1.bf16.msra.mxu0 %v2155
        %2192 = vmatprep.subr.bf16.mxu0 0
        %2193 = vmatpush1.bf16.msra.mxu0 %v2156
        %2194 = vmatprep.subr.bf16.mxu0 0
        %2195 = vmatpush1.bf16.msra.mxu0 %v2157
        %2196 = vmatprep.subr.bf16.mxu0 0
        %2197 = vmatpush1.bf16.msra.mxu0 %v2158
        %2198 = vmatprep.subr.bf16.mxu0 0
        %2199 = vmatpush1.bf16.msra.mxu0 %v2159
        %2200 = vmatprep.subr.bf16.mxu0 0
        %2201 = vmatpush1.bf16.msra.mxu0 %v2160
        %2202 = vmatprep.subr.bf16.mxu0 0
        %2203 = vmatpush1.bf16.msra.mxu0 %v2161
        %2204 = vmatprep.subr.bf16.mxu0 0
        %2205 = vmatpush1.bf16.msra.mxu0 %v2162
        %2206 = vmatprep.subr.bf16.mxu0 0
        %2207 = vmatpush1.bf16.msra.mxu0 %v2163
        %2208 = vmatprep.subr.bf16.mxu0 0
        %2209 = vmatpush1.bf16.msra.mxu0 %v2164
        %2210 = vmatprep.subr.bf16.mxu0 0
        %2211 = vmatpush1.bf16.msra.mxu0 %v2165
        %2212 = vmatprep.subr.bf16.mxu0 0
        %2213 = vmatpush1.bf16.msra.mxu0 %v2166
        %2214 = vmatprep.subr.bf16.mxu0 0
        %2215 = vmatpush1.bf16.msra.mxu0 %v2167
        %2216 = vmatprep.mubr.bf16.mxu0 %v2051
        %2217 = vmatmul.mubr.bf16.gmra.mrb[0].mxu0 %v2050
        %v2218 = vpop.f32.mrb[0].mxu0
        %v2219 = vadd.f32 %v2087, %v2218
        %v2220 = vpop.f32.mrb[0].mxu0
        %v2221 = vpop.f32.mrb[0].mxu0
        %v2222 = vpop.f32.mrb[0].mxu0
        %2223 = vdwg.mxu0
        %v2224 = vadd.f32 %v1909, %v2219
        %2225 = vst.msk [vmem:[#allocation2] sm:$0xff] %vm1215, %v2224
        %p2226 = scmp.eq.s32.totalorder %s43, 1
        // Predicated region
        $region105: #{clip_backbone_forward.1} parent=59 // pred_check
          %p2227 = pneg %p2226
        $region106: #{clip_backbone_forward.1} parent=59 // pred_check_branch
          %2229 = sbr.rel (%p2227) target = $region108
        $region107: #{clip_backbone_forward.1} parent=59 // pred_region
          %v2230 = vld [vmem:[#allocation9 + $0x2] sm:$0x1]
          %v2231 = vld [vmem:[#allocation9 + $0x3] sm:$0x1]
          %vm2232 = vcmask 516096
          %v2233 = vsel %vm2232, %v2224, 0.0
          %2234 = vadd.xlane.f32.xlu0 %v2233
          %v2235 = vpop.xlane.xlu0 %2234
          %v2236 = vmul.f32 %v2235, %v1219
          %v2237 = vsub.f32 %v2224, %v2236
          %v2238 = vmul.f32 %v2237, %v2237
          %v2239 = vsel %vm2232, %v2238, 0.0
          %2240 = vadd.xlane.f32.xlu0 %v2239
          %v2241 = vpop.xlane.xlu0 %2240
          %v2242 = vmul.f32 %v2241, %v1219
          %v2243 = vadd.f32 %v2242, 1e-05
          %v2244 = vrsqrt.pop %v2243
          %v2245 = vmul.f32 %v2237, %v2244
          %v2246 = vmul.f32 %v2245, %v2230
          %v2247 = vadd.f32 %v2246, %v2231
          %v2248 = vpack.c.bf16 %v2247, %v2247
          %v2249 = vld [vmem:[#allocation11] sm:$0xf]
          %v2250 = vld [vmem:[#allocation11 + $0x4] sm:$0xf]
          %v2251 = vld [vmem:[#allocation11 + $0x8] sm:$0xf]
          %v2252 = vld [vmem:[#allocation11 + $0xc] sm:$0xf]
          %v2253 = vld [vmem:[#allocation11 + $0x10] sm:$0xf]
          %v2254 = vld [vmem:[#allocation11 + $0x14] sm:$0xf]
          %v2255 = vld [vmem:[#allocation11 + $0x18] sm:$0xf]
          %v2256 = vld [vmem:[#allocation11 + $0x1c] sm:$0xf]
          %v2265 = vunpack.c.l.b16 %v2249
          %v2266 = vunpack.c.l.b16 %v2250
          %v2267 = vunpack.c.l.b16 %v2251
          %v2268 = vunpack.c.l.b16 %v2252
          %v2269 = vunpack.c.l.b16 %v2253
          %v2270 = vunpack.c.l.b16 %v2254
          %v2271 = vunpack.c.l.b16 %v2255
          %v2272 = vunpack.c.l.b16 %v2256
          %v2273 = vpack.c.b16 %v2266, %v2265
          %v2274 = vpack.c.b16 %v2268, %v2267
          %v2275 = vpack.c.b16 %v2270, %v2269
          %v2276 = vpack.c.b16 %v2272, %v2271
          %v2282 = vsel %vm1215, %v2248, 0
          %2284 = vmatprep.subr.bf16.mxu0 0
          %2285 = vmatpush1.bf16.msra.mxu0 %v2273
          %2286 = vmatprep.subr.bf16.mxu0 0
          %2287 = vmatpush1.bf16.msra.mxu0 %v2274
          %2288 = vmatprep.subr.bf16.mxu0 0
          %2289 = vmatpush1.bf16.msra.mxu0 %v2275
          %2290 = vmatprep.subr.bf16.mxu0 0
          %2291 = vmatpush1.bf16.msra.mxu0 %v2276
          %2292 = vmatprep.subr.bf16.mxu0 0
          %2293 = vmatpush1.bf16.msra.mxu0 0
          %2294 = vmatprep.subr.bf16.mxu0 0
          %2295 = vmatpush1.bf16.msra.mxu0 0
          %2296 = vmatprep.subr.bf16.mxu0 0
          %2297 = vmatpush1.bf16.msra.mxu0 0
          %2298 = vmatprep.subr.bf16.mxu0 0
          %2299 = vmatpush1.bf16.msra.mxu0 0
          %2300 = vmatprep.subr.bf16.mxu0 0
          %2301 = vmatpush1.bf16.msra.mxu0 0
          %2302 = vmatprep.subr.bf16.mxu0 0
          %2303 = vmatpush1.bf16.msra.mxu0 0
          %2304 = vmatprep.subr.bf16.mxu0 0
          %2305 = vmatpush1.bf16.msra.mxu0 0
          %2306 = vmatprep.subr.bf16.mxu0 0
          %2307 = vmatpush1.bf16.msra.mxu0 0
          %2308 = vmatprep.subr.bf16.mxu0 0
          %2309 = vmatpush1.bf16.msra.mxu0 0
          %2310 = vmatprep.subr.bf16.mxu0 0
          %2311 = vmatpush1.bf16.msra.mxu0 0
          %2312 = vmatprep.subr.bf16.mxu0 0
          %2313 = vmatpush1.bf16.msra.mxu0 0
          %2314 = vmatprep.subr.bf16.mxu0 0
          %2315 = vmatpush1.bf16.msra.mxu0 0
          %2316 = vmatprep.mubr.bf16.mxu0 0
          %2317 = vmatmul.mubr.bf16.gmra.mrb[0].mxu0 %v2282
          %v2318 = vpop.f32.mrb[0].mxu0
          %v2319 = vadd.f32 0.0, %v2318
          %v2320 = vpop.f32.mrb[0].mxu0
          %v2321 = vpop.f32.mrb[0].mxu0
          %v2322 = vpop.f32.mrb[0].mxu0
          %2323 = vdwg.mxu0
          %vm2324 = vcmask 253952
          %2325 = vst.msk [vmem:[%s632] sm:$0x1] %vm2324, %v2319
        $region108: #{clip_backbone_forward.1} parent=59 // pred_fallthru
          _
        %s2326 = sand.u32 %s298, 1
        %s2327 = scalar_lea.sflag [#allocation5], %s2326
        %s2328 = sand.u32 %s298, 1
        %s2329 = scalar_lea.vmem [#allocation20], %s2328
        // Predicated region
        $region109: #{clip_backbone_forward.1} parent=59 // pred_check
          %p2330 = pneg %p308
        $region110: #{clip_backbone_forward.1} parent=59 // pred_check_branch
          %2332 = sbr.rel (%p2330) target = $region112
        $region111: #{clip_backbone_forward.1} parent=59 // pred_region
          %s2334 = ssub.s32 16, 16
          %2335 = vsyncadd %s2327, %s2334
          %s2336 = smul.addr %s42, 16
          %s2337 = scalar_lea.hbm %s10, %s2336
          %s2339 = sshll.u32 %s2329, 4
          %s2340 = int_to_ptr.vmem [resolvable:$true] %s2339
          %2342 = dma.vmem_to_hbm [thread:$0]  %s2340, 16, %s2337, %s2327
        $region112: #{clip_backbone_forward.1} parent=59 // pred_fallthru
          _
      $region60: #{clip_backbone_forward.1} parent=5 // pred_fallthru
        _
      %p2343 = scmp.le.s32.totalorder 2, %s33
      // Predicated region
      $region113: #{clip_backbone_forward.1} parent=5 // pred_check
        %p2344 = pneg %p2343
      $region114: #{clip_backbone_forward.1} parent=5 // pred_check_branch
        %2346 = sbr.rel (%p2344) target = $region116
      $region115: #{clip_backbone_forward.1} parent=5 // pred_region
        %s2347 = ssub.s32 %s33, 2
        // Predicated region
        $region117: #{clip_backbone_forward.1} parent=115 // pred_check
          %p2348 = pneg %p314
        $region118: #{clip_backbone_forward.1} parent=115 // pred_check_branch
          %2350 = sbr.rel (%p2348) target = $region120
        $region119: #{clip_backbone_forward.1} parent=115 // pred_region
          %s2351 = sand.u32 %s299, 1
          %s2352 = scalar_lea.sflag [#allocation5], %s2351
          %s2353 = sand.u32 %s299, 1
          %s2354 = scalar_lea.vmem [#allocation20], %s2353
          %2355 = dma.done %s2352, 16
        $region120: #{clip_backbone_forward.1} parent=115 // pred_fallthru
          _
      $region116: #{clip_backbone_forward.1} parent=5 // pred_fallthru
        _
    $region6: #{clip_backbone_forward.1} parent=1 // loop_footer
      %s37 = sadd.s32 1, %s33
    $region7: #{clip_backbone_forward.1} parent=1 // loop_footer_branch
      %32 = sbr.rel target = $region3
    $region8: #{clip_backbone_forward.1} parent=1 // loop_exit
      _
    %2356 = vsyncpa [#allocation4], 1
    %s2357 = scalar_lea.sflag [#allocation4], 1
    %2358 = vsyncpa %s2357, 1
    %2359 = vsyncpa [#allocation7], 1
    %2360 = vsyncpa [#allocation10], 1
    %2361 = vsyncpa [#allocation13], 1
    %s2362 = scalar_lea.sflag [#allocation13], 1
    %2363 = vsyncpa %s2362, 1
    %2364 = vsyncpa [#allocation16], 1
    %s2365 = scalar_lea.sflag [#allocation16], 1
    %2366 = vsyncpa %s2365, 1
    %2367 = vsyncpa [#allocation19], 1
    %s2368 = scalar_lea.sflag [#allocation19], 1
    %2369 = vsyncpa %s2368, 1
    %2370 = vsyncpa [#allocation5], 1
    %s2371 = scalar_lea.sflag [#allocation5], 1
    %2372 = vsyncpa %s2371, 1

</llo_original>
